<compile_context>
chip_gen: v5e
topology: v5e:2x2
jax: 0.10.0
libtpu: 0.0.40
codegen_flags: <defaults>
</compile_context>

<pallas_src>
import functools

import jax
import jax.numpy as jnp
import numpy as np
from jax.experimental import pallas as pl
from jax.experimental.pallas import tpu as pltpu


def _attention2_kernel(z_ref, w1_ref, b1_ref, w2_ref, out_ref, beta_ref, *,
                       elem_dtype):
    # z_ref:    (block_b, S, D)   input slab, native dtype (f32 or bf16)
    # w1_ref:   (D, H)            Linear(D,H) weight   (grid-invariant, stays in VMEM)
    # b1_ref:   (1, H)            Linear(D,H) bias
    # w2_ref:   (1, H)            Linear(H,1) weight as a row vector
    # out_ref:  (block_b, 1, D)   weighted sum         (z.dtype)
    # beta_ref: (block_b, S, 1)   softmax weights      (float32)
    block_b, s, d = z_ref.shape
    h_dim = w1_ref.shape[1]

    z = z_ref[...]                                           # native dtype

    # ---- Linear(D,H) + tanh: fold (block_b, S) into M -> ONE MXU matmul --------
    # (S is a multiple of the sublane tile at the demo shape, so the fold/split is
    #  a tile-aligned relabel, not a relayout.)
    zf = z.reshape(block_b * s, d)                           # (M, D)
    h = jnp.dot(zf, w1_ref[...], preferred_element_type=jnp.float32)   # (M, H) f32
    h = jnp.tanh((h + b1_ref[...].astype(jnp.float32)).astype(elem_dtype))

    # ---- Linear(H,1), no bias: VPU multiply + lane (H) reduction ---------------
    # (no batched M=1 MXU matmuls, no materialized (block_b,1,H) broadcast)
    h3 = h.reshape(block_b, s, h_dim)                        # (block_b, S, H)
    w2 = w2_ref[...].astype(elem_dtype).reshape(1, 1, h_dim) # (1, 1, H)
    score = jnp.sum((h3 * w2).astype(jnp.float32), axis=-1,
                    keepdims=True)                           # (block_b, S, 1) f32

    # ---- softmax over the sequence axis (exact reciprocal) ---------------------
    m = jnp.max(score, axis=1, keepdims=True)                # (block_b, 1, 1)
    e = jnp.exp(score - m)                                   # (block_b, S, 1)
    inv = 1.0 / jnp.sum(e, axis=1, keepdims=True)            # (block_b, 1, 1) exact

    # ---- weighted sum over S: VPU multiply + sublane reduce, normalize once ----
    acc = jnp.sum(e * z.astype(jnp.float32), axis=1, keepdims=True)   # (block_b, 1, D)

    out_ref[...] = (acc * inv).astype(out_ref.dtype)
    beta_ref[...] = (e * inv).astype(beta_ref.dtype)         # always f32


def _tpu_hw_info():
    """(num_tensorcores_per_chip, vmem_capacity_bytes, device_kind)."""
    kind = ""
    try:
        kind = jax.devices()[0].device_kind.lower()
    except Exception:
        pass
    multi_core = any(tag in kind for tag in ("v7", "tpu7", "v4", "v5p"))
    num_tc = 2 if multi_core else 1                       # v5e / v6e: 1 TensorCore
    vmem_bytes = 64 * 1024 * 1024                         # conservative (v7x) fallback
    try:
        vmem_bytes = int(pltpu.get_tpu_info().vmem_capacity_bytes)
    except Exception:
        pass
    return num_tc, vmem_bytes, kind


def _kernel_vmem_bytes(block_b, s, d, h, in_itemsize):
    """Rough per-step working set (double-buffered I/O + weights + activations)."""
    z_blk = 2 * block_b * s * d * in_itemsize
    outs = 2 * (block_b * d * in_itemsize + block_b * s * 4)
    wts = 2 * (d * h + 2 * h) * 4
    live = 8 * block_b * s * h * 4                        # h / exp / temporaries headroom
    return z_blk + outs + wts + live


def _choose_block_b(batch, s, d, h, in_itemsize, num_tc, vmem_bytes):
    """Largest divisor of `batch` whose working set fits a VMEM budget.

    Single-TC chips (v5e/v6e): the grid is a sequential loop (~0.35 us/step), so one
    big step is best.  Multi-TC chips (v7x): keep >= num_tc grid steps so every
    TensorCore gets work via dimension_semantics=("parallel",).
    """
    budget = vmem_bytes // 3
    divisors = [x for x in range(1, batch + 1) if batch % x == 0]
    fitting = [x for x in divisors
               if _kernel_vmem_bytes(x, s, d, h, in_itemsize) <= budget] or [1]
    if num_tc >= 2:
        multi = [x for x in fitting if batch // x >= num_tc]
        if multi:
            return max(multi)
    return max(fitting)


def attention2(z, w1, b1, w2, block_b=None):
    """z: (B, S, D), w1: (D, H), b1: (1, H), w2: (H, 1) -> ((B, D), (B, S, 1))."""
    B, S, D = z.shape
    H = w1.shape[1]
    in_itemsize = z.dtype.itemsize

    num_tc, vmem_bytes, kind = _tpu_hw_info()
    if block_b is None:
        block_b = _choose_block_b(B, S, D, H, in_itemsize, num_tc, vmem_bytes)
    if B % block_b != 0:
        raise ValueError(f"block_b={block_b} must divide batch={B}")
    n_blocks = B // block_b

    # bf16 elementwise tanh only where the VPU/EUP supports bf16 (v6e/v7x, not v5e).
    use_bf16_elem = (z.dtype == jnp.bfloat16) and any(t in kind for t in ("v6", "v7", "tpu7"))
    elem_dtype = jnp.bfloat16 if use_bf16_elem else jnp.float32

    # Raise the scoped-VMEM limit (v5e default is 16 MiB) but stay below physical
    # capacity (v7x only has 64 MiB).
    need = _kernel_vmem_bytes(block_b, S, D, H, in_itemsize)
    vmem_limit = int(min(max(2 * need, 32 * 1024 * 1024), (3 * vmem_bytes) // 4))

    w2_row = jnp.reshape(w2, (1, H))
    kernel = functools.partial(_attention2_kernel, elem_dtype=elem_dtype)

    out3, beta = pl.pallas_call(
        kernel,
        out_shape=(
            jax.ShapeDtypeStruct((B, 1, D), z.dtype),
            jax.ShapeDtypeStruct((B, S, 1), jnp.float32),
        ),
        grid_spec=pltpu.PrefetchScalarGridSpec(
            num_scalar_prefetch=0,
            grid=(n_blocks,),
            in_specs=[
                pl.BlockSpec((block_b, S, D), lambda b: (b, 0, 0)),
                # Grid-invariant index maps: weights stay resident in VMEM.
                pl.BlockSpec((D, H), lambda b: (0, 0)),
                pl.BlockSpec((1, H), lambda b: (0, 0)),
                pl.BlockSpec((1, H), lambda b: (0, 0)),
            ],
            out_specs=[
                pl.BlockSpec((block_b, 1, D), lambda b: (b, 0, 0)),
                pl.BlockSpec((block_b, S, 1), lambda b: (b, 0, 0)),
            ],
        ),
        compiler_params=pltpu.CompilerParams(
            dimension_semantics=("parallel",),
            vmem_limit_bytes=vmem_limit,
        ),
    )(z, w1, b1, w2_row)

    out = out3.reshape(B, D)          # free layout plumbing outside the kernel
    return out, beta                  # beta is already (B, S, 1), f32


def _reference(z, w1, b1, w2):
    # Pure-JAX reference matching the PyTorch semantics; highest matmul precision so
    # the comparison is not polluted by XLA's default bf16 matmul passes.
    hp = jax.lax.Precision.HIGHEST
    h = jnp.tanh(jnp.einsum("bsd,dh->bsh", z, w1, precision=hp) + b1[0])   # (B, S, H)
    w = jnp.einsum("bsh,ho->bso", h, w2, precision=hp)                     # (B, S, 1)
    beta = jax.nn.softmax(w, axis=1)                                       # (B, S, 1)
    out = jnp.sum(beta * z, axis=1)                                        # (B, D)
    return out, beta


if __name__ == "__main__":
    key = jax.random.PRNGKey(0)
    # batch=32, seq=8, in_size=32, hidden_size=128 (module default hidden).
    # Single-TC chips: block_b=32 -> grid=(1,), M=256.  v7x: block_b=16 -> grid=(2,).
    B, S, D, H = 32, 8, 32, 128

    k_z, k_w1, k_b1, k_w2 = jax.random.split(key, 4)
    z = jax.random.normal(k_z, (B, S, D), dtype=jnp.float32)

    # Deterministic PyTorch-style uniform(-1/sqrt(fan_in), 1/sqrt(fan_in)) init.
    lim1 = 1.0 / np.sqrt(D)
    lim2 = 1.0 / np.sqrt(H)
    w1 = jax.random.uniform(k_w1, (D, H), minval=-lim1, maxval=lim1, dtype=jnp.float32)
    b1 = jax.random.uniform(k_b1, (1, H), minval=-lim1, maxval=lim1, dtype=jnp.float32)
    w2 = jax.random.uniform(k_w2, (H, 1), minval=-lim2, maxval=lim2, dtype=jnp.float32)

    out, beta = attention2(z, w1, b1, w2)
    out = jax.block_until_ready(out)
    beta = jax.block_until_ready(beta)

    ref_out, ref_beta = _reference(z, w1, b1, w2)
    assert out.shape == (B, D) and beta.shape == (B, S, 1)
    # Exact softmax normalization (no approx reciprocal) -> tight tolerance.
    np.testing.assert_allclose(np.asarray(out), np.asarray(ref_out), atol=1e-5, rtol=1e-5)
    np.testing.assert_allclose(np.asarray(beta), np.asarray(ref_beta), atol=1e-5, rtol=1e-5)

    print("KERNEL_OK")
</pallas_src>

<mosaic_0001>
module attributes {stable_mosaic.version = 11 : i64} {
  func.func @_attention2_kernel(%arg0: i32, %arg1: memref<32x8x32xf32, #tpu.memory_space<vmem>>, %arg2: memref<32x128xf32, #tpu.memory_space<vmem>>, %arg3: memref<1x128xf32, #tpu.memory_space<vmem>>, %arg4: memref<1x128xf32, #tpu.memory_space<vmem>>, %arg5: memref<32x1x32xf32, #tpu.memory_space<vmem>>, %arg6: memref<32x8x1xf32, #tpu.memory_space<vmem>>) attributes {dimension_semantics = [#tpu.dimension_semantics<parallel>], iteration_bounds = array<i64: 1>, scalar_prefetch = 0 : i64, scratch_operands = 0 : i64, tpu.core_type = #tpu.core_type<tc>, window_params = [{transform_indices = @transform_0, window_bounds = array<i64: 32, 8, 32>}, {pipeline_mode = #tpu.pipeline_mode<synchronous>, transform_indices = @transform_1, window_bounds = array<i64: 32, 128>}, {pipeline_mode = #tpu.pipeline_mode<synchronous>, transform_indices = @transform_2, window_bounds = array<i64: 1, 128>}, {pipeline_mode = #tpu.pipeline_mode<synchronous>, transform_indices = @transform_3, window_bounds = array<i64: 1, 128>}, {transform_indices = @transform_4, window_bounds = array<i64: 32, 1, 32>}, {transform_indices = @transform_5, window_bounds = array<i64: 32, 8, 1>}]} {
    %c0 = arith.constant 0 : index
    %c0_0 = arith.constant 0 : index
    %c0_1 = arith.constant 0 : index
    %0 = vector.load %arg1[%c0, %c0_0, %c0_1] : memref<32x8x32xf32, #tpu.memory_space<vmem>>, vector<32x8x32xf32>
    %1 = vector.shape_cast %0 : vector<32x8x32xf32> to vector<256x32xf32>
    %c0_2 = arith.constant 0 : index
    %c0_3 = arith.constant 0 : index
    %2 = vector.load %arg2[%c0_2, %c0_3] : memref<32x128xf32, #tpu.memory_space<vmem>>, vector<32x128xf32>
    %cst = arith.constant dense<0.000000e+00> : vector<256x128xf32>
    %3 = tpu.matmul %1, %2, %cst {dimension_numbers = #tpu.dot_dimension_numbers<[1], [0], [0], [1], [0, 0, 1, 1], [], []>} : vector<256x32xf32>, vector<32x128xf32>, vector<256x128xf32> -> vector<256x128xf32>
    %c0_4 = arith.constant 0 : index
    %c0_5 = arith.constant 0 : index
    %4 = vector.load %arg3[%c0_4, %c0_5] : memref<1x128xf32, #tpu.memory_space<vmem>>, vector<1x128xf32>
    %5 = vector.broadcast %4 : vector<1x128xf32> to vector<256x128xf32>
    %6 = arith.addf %3, %5 : vector<256x128xf32>
    %7 = math.tanh %6 : vector<256x128xf32>
    %8 = vector.shape_cast %7 : vector<256x128xf32> to vector<32x8x128xf32>
    %c0_6 = arith.constant 0 : index
    %c0_7 = arith.constant 0 : index
    %9 = vector.load %arg4[%c0_6, %c0_7] : memref<1x128xf32, #tpu.memory_space<vmem>>, vector<1x128xf32>
    %10 = vector.shape_cast %9 : vector<1x128xf32> to vector<1x1x128xf32>
    %11 = vector.broadcast %10 : vector<1x1x128xf32> to vector<32x8x128xf32>
    %12 = arith.mulf %8, %11 : vector<32x8x128xf32>
    %cst_8 = arith.constant dense<0.000000e+00> : vector<32x8xf32>
    %13 = vector.multi_reduction <add>, %12, %cst_8 [2] : vector<32x8x128xf32> to vector<32x8xf32>
    %14 = vector.shape_cast %13 : vector<32x8xf32> to vector<32x8x1xf32>
    %cst_9 = arith.constant dense<0xFF800000> : vector<32x1xf32>
    %15 = vector.multi_reduction <maximumf>, %14, %cst_9 [1] : vector<32x8x1xf32> to vector<32x1xf32>
    %16 = vector.shape_cast %15 : vector<32x1xf32> to vector<32x1x1xf32>
    %17 = vector.broadcast %16 : vector<32x1x1xf32> to vector<32x8x1xf32>
    %18 = arith.subf %14, %17 : vector<32x8x1xf32>
    %19 = math.exp %18 : vector<32x8x1xf32>
    %cst_10 = arith.constant dense<0.000000e+00> : vector<32x1xf32>
    %20 = vector.multi_reduction <add>, %19, %cst_10 [1] : vector<32x8x1xf32> to vector<32x1xf32>
    %21 = vector.shape_cast %20 : vector<32x1xf32> to vector<32x1x1xf32>
    %cst_11 = arith.constant 1.000000e+00 : f32
    %22 = vector.broadcast %cst_11 : f32 to vector<32x1x1xf32>
    %23 = arith.divf %22, %21 : vector<32x1x1xf32>
    %24 = vector.broadcast %19 : vector<32x8x1xf32> to vector<32x8x32xf32>
    %25 = arith.mulf %24, %0 : vector<32x8x32xf32>
    %cst_12 = arith.constant dense<0.000000e+00> : vector<32x32xf32>
    %26 = vector.multi_reduction <add>, %25, %cst_12 [1] : vector<32x8x32xf32> to vector<32x32xf32>
    %27 = vector.shape_cast %26 : vector<32x32xf32> to vector<32x1x32xf32>
    %28 = vector.broadcast %23 : vector<32x1x1xf32> to vector<32x1x32xf32>
    %29 = arith.mulf %27, %28 : vector<32x1x32xf32>
    %c0_13 = arith.constant 0 : index
    %c0_14 = arith.constant 0 : index
    %c0_15 = arith.constant 0 : index
    %30 = vector.load %arg5[%c0_13, %c0_14, %c0_15] : memref<32x1x32xf32, #tpu.memory_space<vmem>>, vector<32x1x32xf32>
    tpu.vector_store %arg5[%c0_13, %c0_14, %c0_15], %29 {strides = array<i32>} : memref<32x1x32xf32, #tpu.memory_space<vmem>>, vector<32x1x32xf32>,
    %31 = vector.broadcast %23 : vector<32x1x1xf32> to vector<32x8x1xf32>
    %32 = arith.mulf %19, %31 : vector<32x8x1xf32>
    %c0_16 = arith.constant 0 : index
    %c0_17 = arith.constant 0 : index
    %c0_18 = arith.constant 0 : index
    %33 = vector.load %arg6[%c0_16, %c0_17, %c0_18] : memref<32x8x1xf32, #tpu.memory_space<vmem>>, vector<32x8x1xf32>
    tpu.vector_store %arg6[%c0_16, %c0_17, %c0_18], %32 {strides = array<i32>} : memref<32x8x1xf32, #tpu.memory_space<vmem>>, vector<32x8x1xf32>,
    return
  }
  func.func @transform_0(%arg0: i32) -> (i32, i32, i32) {
    %c0_i32 = arith.constant 0 : i32
    %c0_i32_0 = arith.constant 0 : i32
    %c0_i32_1 = arith.constant 0 : i32
    return %arg0, %c0_i32, %c0_i32_0 : i32, i32, i32
  }
  func.func @transform_1(%arg0: i32) -> (i32, i32) {
    %c0_i32 = arith.constant 0 : i32
    %c0_i32_0 = arith.constant 0 : i32
    %c0_i32_1 = arith.constant 0 : i32
    return %c0_i32, %c0_i32_0 : i32, i32
  }
  func.func @transform_2(%arg0: i32) -> (i32, i32) {
    %c0_i32 = arith.constant 0 : i32
    %c0_i32_0 = arith.constant 0 : i32
    %c0_i32_1 = arith.constant 0 : i32
    return %c0_i32, %c0_i32_0 : i32, i32
  }
  func.func @transform_3(%arg0: i32) -> (i32, i32) {
    %c0_i32 = arith.constant 0 : i32
    %c0_i32_0 = arith.constant 0 : i32
    %c0_i32_1 = arith.constant 0 : i32
    return %c0_i32, %c0_i32_0 : i32, i32
  }
  func.func @transform_4(%arg0: i32) -> (i32, i32, i32) {
    %c0_i32 = arith.constant 0 : i32
    %c0_i32_0 = arith.constant 0 : i32
    %c0_i32_1 = arith.constant 0 : i32
    return %arg0, %c0_i32, %c0_i32_0 : i32, i32, i32
  }
  func.func @transform_5(%arg0: i32) -> (i32, i32, i32) {
    %c0_i32 = arith.constant 0 : i32
    %c0_i32_0 = arith.constant 0 : i32
    %c0_i32_1 = arith.constant 0 : i32
    return %arg0, %c0_i32, %c0_i32_0 : i32, i32, i32
  }
}

</mosaic_0001>

<llo_original>
// kernel: tpu_custom_call.1
$region0: #{tpu_custom_call.1}
  #allocation0 [shape = 'u32[]', space=smem, size = 0x4, offset = 0x4, fixed_abs, tag = 'smem constant byte address 0x4 - core index']
  #allocation1 [shape = 'u32[72,128]{1,0:T(1,128)}', space=vmem, size = 0x9000, scoped, tag = 'internal scratch']
  %s0 = inlined_call_operand.hbm [shape: f32[32,8,32], index: 0, kind: input, shape index: {}]
  %s1 = inlined_call_operand.hbm [shape: f32[32,128], index: 1, kind: input, shape index: {}]
  %s2 = inlined_call_operand.vmem [shape: f32[1,128], index: 2, kind: input, shape index: {}]
  %s3 = inlined_call_operand.vmem [shape: f32[1,128], index: 3, kind: input, shape index: {}]
  %s4 = inlined_call_operand.hbm [shape: f32[32,1,32], index: 4, kind: output, shape index: {0}]
  %s5 = inlined_call_operand.vmem [shape: f32[32,8,1], index: 5, kind: output, shape index: {1}]
  %6 = xla_tuple %s4, %s5
  %s7 = sld [smem:[#allocation0]]
  $region42: #{tpu_custom_call.1} parent=0
    _
  %s9 = ssub.s32 1, %s7
  %s10 = scalar_select 0, %s9, %s7
  $region1: #{tpu_custom_call.1} parent=0
    #allocation2 [shape = 'u8[131072]{0}', space=vmem, size = 0x20000, scoped, tag = 'input window, operand 0, single buffered']
    #allocation3 [shape = 's32[1]{0}', space=sflag, size = 0x4, scoped, tag = 'scoped memory for tpu_custom_call.1']
    #allocation4 [shape = 's32[1]{0}', space=sflag, size = 0x4, scoped, tag = 'scoped memory for tpu_custom_call.1']
    #allocation5 [shape = 'u8[16384]{0}', space=vmem, size = 0x4000, scoped, tag = 'input window, operand 1, single buffered']
    #allocation6 [shape = 's32[1]{0}', space=sflag, size = 0x4, scoped, tag = 'scoped memory for tpu_custom_call.1']
    #allocation7 [shape = 'u8[16384]{0}', space=vmem, size = 0x4000, scoped, tag = 'output window, operand 0, single buffered']
    %11 = vsyncpa [#allocation3], 0
    %12 = vsyncpa [#allocation6], 0
    %13 = vsyncpa [#allocation4], 0
    // Predicated region
    $region2: #{tpu_custom_call.1} parent=1 // pred_check
      _
    $region3: #{tpu_custom_call.1} parent=1 // pred_check_branch
      %15 = sbr.rel (0) target = $region5
    $region4: #{tpu_custom_call.1} parent=1 // pred_region
      %17 = vsyncadd [#allocation3], 0
      %s18 = sshll.u32 %s0, 4
      %s19 = int_to_ptr.hbm [resolvable:$true] %s18
      %s20 = sshll.u32 [#allocation2], 4
      %s21 = int_to_ptr.vmem [resolvable:$true] %s20
      %26 = dma.hbm_to_vmem [thread:$0]  %s19, 4096, %s21, [#allocation3], 128, 128, 8
    $region5: #{tpu_custom_call.1} parent=1 // pred_fallthru
      _
    // Predicated region
    $region6: #{tpu_custom_call.1} parent=1 // pred_check
      _
    $region7: #{tpu_custom_call.1} parent=1 // pred_check_branch
      %28 = sbr.rel (0) target = $region9
    $region8: #{tpu_custom_call.1} parent=1 // pred_region
      %30 = vsyncadd [#allocation6], 0
      %s31 = sshll.u32 %s1, 4
      %s32 = int_to_ptr.hbm [resolvable:$true] %s31
      %s33 = sshll.u32 [#allocation5], 4
      %s34 = int_to_ptr.vmem [resolvable:$true] %s33
      %39 = dma.hbm_to_vmem [thread:$0]  %s32, 512, %s34, [#allocation6], 128, 128, 8
    $region9: #{tpu_custom_call.1} parent=1 // pred_fallthru
      _
    // Predicated region
    $region10: #{tpu_custom_call.1} parent=1 // pred_check
      _
    $region11: #{tpu_custom_call.1} parent=1 // pred_check_branch
      %41 = sbr.rel (0) target = $region13
    $region12: #{tpu_custom_call.1} parent=1 // pred_region
      _
    $region13: #{tpu_custom_call.1} parent=1 // pred_fallthru
      _
    // Predicated region
    $region14: #{tpu_custom_call.1} parent=1 // pred_check
      _
    $region15: #{tpu_custom_call.1} parent=1 // pred_check_branch
      %43 = sbr.rel (0) target = $region17
    $region16: #{tpu_custom_call.1} parent=1 // pred_region
      _
    $region17: #{tpu_custom_call.1} parent=1 // pred_fallthru
      _
    // Predicated region
    $region18: #{tpu_custom_call.1} parent=1 // pred_check
      _
    $region19: #{tpu_custom_call.1} parent=1 // pred_check_branch
      %45 = sbr.rel (0) target = $region21
    $region20: #{tpu_custom_call.1} parent=1 // pred_region
      %47 = dma.done [#allocation3], 4096
    $region21: #{tpu_custom_call.1} parent=1 // pred_fallthru
      _
    // Predicated region
    $region22: #{tpu_custom_call.1} parent=1 // pred_check
      _
    $region23: #{tpu_custom_call.1} parent=1 // pred_check_branch
      %49 = sbr.rel (0) target = $region25
    $region24: #{tpu_custom_call.1} parent=1 // pred_region
      %51 = dma.done [#allocation6], 512
    $region25: #{tpu_custom_call.1} parent=1 // pred_fallthru
      _
    %v52 = vld [vmem:[#allocation2] sm:$0xff]
    %v53 = vld [vmem:[#allocation2 + $0x8] sm:$0xff]
    %v54 = vld [vmem:[#allocation2 + $0x10] sm:$0xff]
    %v55 = vld [vmem:[#allocation2 + $0x18] sm:$0xff]
    %v56 = vld [vmem:[#allocation2 + $0x20] sm:$0xff]
    %v57 = vld [vmem:[#allocation2 + $0x28] sm:$0xff]
    %v58 = vld [vmem:[#allocation2 + $0x30] sm:$0xff]
    %v59 = vld [vmem:[#allocation2 + $0x38] sm:$0xff]
    %v60 = vld [vmem:[#allocation2 + $0x40] sm:$0xff]
    %v61 = vld [vmem:[#allocation2 + $0x48] sm:$0xff]
    %v62 = vld [vmem:[#allocation2 + $0x50] sm:$0xff]
    %v63 = vld [vmem:[#allocation2 + $0x58] sm:$0xff]
    %v64 = vld [vmem:[#allocation2 + $0x60] sm:$0xff]
    %v65 = vld [vmem:[#allocation2 + $0x68] sm:$0xff]
    %v66 = vld [vmem:[#allocation2 + $0x70] sm:$0xff]
    %v67 = vld [vmem:[#allocation2 + $0x78] sm:$0xff]
    %v68 = vld [vmem:[#allocation2 + $0x80] sm:$0xff]
    %v69 = vld [vmem:[#allocation2 + $0x88] sm:$0xff]
    %v70 = vld [vmem:[#allocation2 + $0x90] sm:$0xff]
    %v71 = vld [vmem:[#allocation2 + $0x98] sm:$0xff]
    %v72 = vld [vmem:[#allocation2 + $0xa0] sm:$0xff]
    %v73 = vld [vmem:[#allocation2 + $0xa8] sm:$0xff]
    %v74 = vld [vmem:[#allocation2 + $0xb0] sm:$0xff]
    %v75 = vld [vmem:[#allocation2 + $0xb8] sm:$0xff]
    %v76 = vld [vmem:[#allocation2 + $0xc0] sm:$0xff]
    %v77 = vld [vmem:[#allocation2 + $0xc8] sm:$0xff]
    %v78 = vld [vmem:[#allocation2 + $0xd0] sm:$0xff]
    %v79 = vld [vmem:[#allocation2 + $0xd8] sm:$0xff]
    %v80 = vld [vmem:[#allocation2 + $0xe0] sm:$0xff]
    %v81 = vld [vmem:[#allocation2 + $0xe8] sm:$0xff]
    %v82 = vld [vmem:[#allocation2 + $0xf0] sm:$0xff]
    %v83 = vld [vmem:[#allocation2 + $0xf8] sm:$0xff]
    %v84 = vld [vmem:[#allocation5] sm:$0xff]
    %v85 = vld [vmem:[#allocation5 + $0x8] sm:$0xff]
    %v86 = vld [vmem:[#allocation5 + $0x10] sm:$0xff]
    %v87 = vld [vmem:[#allocation5 + $0x18] sm:$0xff]
    %v88 = vld [vmem:[%s2] sm:$0x1]
    %v90 = vperm.slane %v88, 0
    %vm92 = vcmask 261120
    %v94 = vsel %vm92, %v52, 0
    %v97 = vsel %vm92, %v53, 0
    %v100 = vsel %vm92, %v54, 0
    %v103 = vsel %vm92, %v55, 0
    %v106 = vsel %vm92, %v56, 0
    %v109 = vsel %vm92, %v57, 0
    %v112 = vsel %vm92, %v58, 0
    %v115 = vsel %vm92, %v59, 0
    %v118 = vsel %vm92, %v60, 0
    %v121 = vsel %vm92, %v61, 0
    %v124 = vsel %vm92, %v62, 0
    %v127 = vsel %vm92, %v63, 0
    %v130 = vsel %vm92, %v64, 0
    %v133 = vsel %vm92, %v65, 0
    %v136 = vsel %vm92, %v66, 0
    %v139 = vsel %vm92, %v67, 0
    %v142 = vsel %vm92, %v68, 0
    %v145 = vsel %vm92, %v69, 0
    %v148 = vsel %vm92, %v70, 0
    %v151 = vsel %vm92, %v71, 0
    %v154 = vsel %vm92, %v72, 0
    %v157 = vsel %vm92, %v73, 0
    %v160 = vsel %vm92, %v74, 0
    %v163 = vsel %vm92, %v75, 0
    %v166 = vsel %vm92, %v76, 0
    %v169 = vsel %vm92, %v77, 0
    %v172 = vsel %vm92, %v78, 0
    %v175 = vsel %vm92, %v79, 0
    %v178 = vsel %vm92, %v80, 0
    %v181 = vsel %vm92, %v81, 0
    %v184 = vsel %vm92, %v82, 0
    %v187 = vsel %vm92, %v83, 0
    %189 = vmatpush.msra.mxu0 0.0
    %190 = vmatpush.msra.mxu0 0.0
    %191 = vmatpush.msra.mxu0 0.0
    %192 = vmatpush.msra.mxu0 0.0
    %193 = vmatpush.msra.mxu0 0.0
    %194 = vmatpush.msra.mxu0 0.0
    %195 = vmatpush.msra.mxu0 0.0
    %196 = vmatpush.msra.mxu0 0.0
    %197 = vmatpush.msra.mxu0 0.0
    %198 = vmatpush.msra.mxu0 0.0
    %199 = vmatpush.msra.mxu0 0.0
    %200 = vmatpush.msra.mxu0 0.0
    %201 = vmatpush.msra.mxu0 %v87
    %202 = vmatpush.msra.mxu0 %v86
    %203 = vmatpush.msra.mxu0 %v85
    %204 = vmatpush.msra.mxu0 %v84
    %205 = vmatmul.f32.gmra.mxu0 %v94
    %v206 = vpop.f32.mrf.mxu0
    %v207 = vadd.f32 %v90, %v206
    %208 = vmatmul.f32.gmra.mxu0 %v97
    %v209 = vpop.f32.mrf.mxu0
    %v210 = vadd.f32 %v90, %v209
    %211 = vmatmul.f32.gmra.mxu0 %v100
    %v212 = vpop.f32.mrf.mxu0
    %v213 = vadd.f32 %v90, %v212
    %214 = vmatmul.f32.gmra.mxu0 %v103
    %v215 = vpop.f32.mrf.mxu0
    %v216 = vadd.f32 %v90, %v215
    %217 = vmatmul.f32.gmra.mxu0 %v106
    %v218 = vpop.f32.mrf.mxu0
    %v219 = vadd.f32 %v90, %v218
    %220 = vmatmul.f32.gmra.mxu0 %v109
    %v221 = vpop.f32.mrf.mxu0
    %v222 = vadd.f32 %v90, %v221
    %223 = vmatmul.f32.gmra.mxu0 %v112
    %v224 = vpop.f32.mrf.mxu0
    %v225 = vadd.f32 %v90, %v224
    %226 = vmatmul.f32.gmra.mxu0 %v115
    %v227 = vpop.f32.mrf.mxu0
    %v228 = vadd.f32 %v90, %v227
    %229 = vmatmul.f32.gmra.mxu0 %v118
    %v230 = vpop.f32.mrf.mxu0
    %v231 = vadd.f32 %v90, %v230
    %232 = vmatmul.f32.gmra.mxu0 %v121
    %v233 = vpop.f32.mrf.mxu0
    %v234 = vadd.f32 %v90, %v233
    %235 = vmatmul.f32.gmra.mxu0 %v124
    %v236 = vpop.f32.mrf.mxu0
    %v237 = vadd.f32 %v90, %v236
    %238 = vmatmul.f32.gmra.mxu0 %v127
    %v239 = vpop.f32.mrf.mxu0
    %v240 = vadd.f32 %v90, %v239
    %241 = vmatmul.f32.gmra.mxu0 %v130
    %v242 = vpop.f32.mrf.mxu0
    %v243 = vadd.f32 %v90, %v242
    %244 = vmatmul.f32.gmra.mxu0 %v133
    %v245 = vpop.f32.mrf.mxu0
    %v246 = vadd.f32 %v90, %v245
    %247 = vmatmul.f32.gmra.mxu0 %v136
    %v248 = vpop.f32.mrf.mxu0
    %v249 = vadd.f32 %v90, %v248
    %250 = vmatmul.f32.gmra.mxu0 %v139
    %v251 = vpop.f32.mrf.mxu0
    %v252 = vadd.f32 %v90, %v251
    %253 = vmatmul.f32.gmra.mxu0 %v142
    %v254 = vpop.f32.mrf.mxu0
    %v255 = vadd.f32 %v90, %v254
    %256 = vmatmul.f32.gmra.mxu0 %v145
    %v257 = vpop.f32.mrf.mxu0
    %v258 = vadd.f32 %v90, %v257
    %259 = vmatmul.f32.gmra.mxu0 %v148
    %v260 = vpop.f32.mrf.mxu0
    %v261 = vadd.f32 %v90, %v260
    %262 = vmatmul.f32.gmra.mxu0 %v151
    %v263 = vpop.f32.mrf.mxu0
    %v264 = vadd.f32 %v90, %v263
    %265 = vmatmul.f32.gmra.mxu0 %v154
    %v266 = vpop.f32.mrf.mxu0
    %v267 = vadd.f32 %v90, %v266
    %268 = vmatmul.f32.gmra.mxu0 %v157
    %v269 = vpop.f32.mrf.mxu0
    %v270 = vadd.f32 %v90, %v269
    %271 = vmatmul.f32.gmra.mxu0 %v160
    %v272 = vpop.f32.mrf.mxu0
    %v273 = vadd.f32 %v90, %v272
    %274 = vmatmul.f32.gmra.mxu0 %v163
    %v275 = vpop.f32.mrf.mxu0
    %v276 = vadd.f32 %v90, %v275
    %277 = vmatmul.f32.gmra.mxu0 %v166
    %v278 = vpop.f32.mrf.mxu0
    %v279 = vadd.f32 %v90, %v278
    %280 = vmatmul.f32.gmra.mxu0 %v169
    %v281 = vpop.f32.mrf.mxu0
    %v282 = vadd.f32 %v90, %v281
    %283 = vmatmul.f32.gmra.mxu0 %v172
    %v284 = vpop.f32.mrf.mxu0
    %v285 = vadd.f32 %v90, %v284
    %286 = vmatmul.f32.gmra.mxu0 %v175
    %v287 = vpop.f32.mrf.mxu0
    %v288 = vadd.f32 %v90, %v287
    %289 = vmatmul.f32.gmra.mxu0 %v178
    %v290 = vpop.f32.mrf.mxu0
    %v291 = vadd.f32 %v90, %v290
    %292 = vmatmul.f32.gmra.mxu0 %v181
    %v293 = vpop.f32.mrf.mxu0
    %v294 = vadd.f32 %v90, %v293
    %295 = vmatmul.f32.gmra.mxu0 %v184
    %v296 = vpop.f32.mrf.mxu0
    %v297 = vadd.f32 %v90, %v296
    %298 = vmatmul.f32.gmra.mxu0 %v187
    %v299 = vpop.f32.mrf.mxu0
    %v300 = vadd.f32 %v90, %v299
    %301 = vdwg.mxu0
    %v302 = vtanh.pop %v207
    %v303 = vtanh.pop %v210
    %v304 = vtanh.pop %v213
    %v305 = vtanh.pop %v216
    %v306 = vtanh.pop %v219
    %v307 = vtanh.pop %v222
    %v308 = vtanh.pop %v225
    %v309 = vtanh.pop %v228
    %v310 = vtanh.pop %v231
    %v311 = vtanh.pop %v234
    %v312 = vtanh.pop %v237
    %v313 = vtanh.pop %v240
    %v314 = vtanh.pop %v243
    %v315 = vtanh.pop %v246
    %v316 = vtanh.pop %v249
    %v317 = vtanh.pop %v252
    %v318 = vtanh.pop %v255
    %v319 = vtanh.pop %v258
    %v320 = vtanh.pop %v261
    %v321 = vtanh.pop %v264
    %v322 = vtanh.pop %v267
    %v323 = vtanh.pop %v270
    %v324 = vtanh.pop %v273
    %v325 = vtanh.pop %v276
    %v326 = vtanh.pop %v279
    %v327 = vtanh.pop %v282
    %v328 = vtanh.pop %v285
    %v329 = vtanh.pop %v288
    %v330 = vtanh.pop %v291
    %v331 = vtanh.pop %v294
    %v332 = vtanh.pop %v297
    %v333 = vtanh.pop %v300
    %v334 = vld [vmem:[%s3] sm:$0x1]
    %v336 = vperm.slane %v334, 0
    %v338 = vmul.f32 %v302, %v336
    %v339 = vmul.f32 %v303, %v336
    %v340 = vmul.f32 %v304, %v336
    %v341 = vmul.f32 %v305, %v336
    %v342 = vmul.f32 %v306, %v336
    %v343 = vmul.f32 %v307, %v336
    %v344 = vmul.f32 %v308, %v336
    %v345 = vmul.f32 %v309, %v336
    %v346 = vmul.f32 %v310, %v336
    %v347 = vmul.f32 %v311, %v336
    %v348 = vmul.f32 %v312, %v336
    %v349 = vmul.f32 %v313, %v336
    %v350 = vmul.f32 %v314, %v336
    %v351 = vmul.f32 %v315, %v336
    %v352 = vmul.f32 %v316, %v336
    %v353 = vmul.f32 %v317, %v336
    %v354 = vmul.f32 %v318, %v336
    %v355 = vmul.f32 %v319, %v336
    %v356 = vmul.f32 %v320, %v336
    %v357 = vmul.f32 %v321, %v336
    %v358 = vmul.f32 %v322, %v336
    %v359 = vmul.f32 %v323, %v336
    %v360 = vmul.f32 %v324, %v336
    %v361 = vmul.f32 %v325, %v336
    %v362 = vmul.f32 %v326, %v336
    %v363 = vmul.f32 %v327, %v336
    %v364 = vmul.f32 %v328, %v336
    %v365 = vmul.f32 %v329, %v336
    %v366 = vmul.f32 %v330, %v336
    %v367 = vmul.f32 %v331, %v336
    %v368 = vmul.f32 %v332, %v336
    %v369 = vmul.f32 %v333, %v336
    %370 = vadd.xlane.f32.xlu0 %v338
    %v371 = vpop.xlane.xlu0 %370
    %372 = vadd.xlane.f32.xlu0 %v339
    %v373 = vpop.xlane.xlu0 %372
    %374 = vadd.xlane.f32.xlu0 %v340
    %v375 = vpop.xlane.xlu0 %374
    %376 = vadd.xlane.f32.xlu0 %v341
    %v377 = vpop.xlane.xlu0 %376
    %378 = vadd.xlane.f32.xlu0 %v342
    %v379 = vpop.xlane.xlu0 %378
    %380 = vadd.xlane.f32.xlu0 %v343
    %v381 = vpop.xlane.xlu0 %380
    %382 = vadd.xlane.f32.xlu0 %v344
    %v383 = vpop.xlane.xlu0 %382
    %384 = vadd.xlane.f32.xlu0 %v345
    %v385 = vpop.xlane.xlu0 %384
    %386 = vadd.xlane.f32.xlu0 %v346
    %v387 = vpop.xlane.xlu0 %386
    %388 = vadd.xlane.f32.xlu0 %v347
    %v389 = vpop.xlane.xlu0 %388
    %390 = vadd.xlane.f32.xlu0 %v348
    %v391 = vpop.xlane.xlu0 %390
    %392 = vadd.xlane.f32.xlu0 %v349
    %v393 = vpop.xlane.xlu0 %392
    %394 = vadd.xlane.f32.xlu0 %v350
    %v395 = vpop.xlane.xlu0 %394
    %396 = vadd.xlane.f32.xlu0 %v351
    %v397 = vpop.xlane.xlu0 %396
    %398 = vadd.xlane.f32.xlu0 %v352
    %v399 = vpop.xlane.xlu0 %398
    %400 = vadd.xlane.f32.xlu0 %v353
    %v401 = vpop.xlane.xlu0 %400
    %402 = vadd.xlane.f32.xlu0 %v354
    %v403 = vpop.xlane.xlu0 %402
    %404 = vadd.xlane.f32.xlu0 %v355
    %v405 = vpop.xlane.xlu0 %404
    %406 = vadd.xlane.f32.xlu0 %v356
    %v407 = vpop.xlane.xlu0 %406
    %408 = vadd.xlane.f32.xlu0 %v357
    %v409 = vpop.xlane.xlu0 %408
    %410 = vadd.xlane.f32.xlu0 %v358
    %v411 = vpop.xlane.xlu0 %410
    %412 = vadd.xlane.f32.xlu0 %v359
    %v413 = vpop.xlane.xlu0 %412
    %414 = vadd.xlane.f32.xlu0 %v360
    %v415 = vpop.xlane.xlu0 %414
    %416 = vadd.xlane.f32.xlu0 %v361
    %v417 = vpop.xlane.xlu0 %416
    %418 = vadd.xlane.f32.xlu0 %v362
    %v419 = vpop.xlane.xlu0 %418
    %420 = vadd.xlane.f32.xlu0 %v363
    %v421 = vpop.xlane.xlu0 %420
    %422 = vadd.xlane.f32.xlu0 %v364
    %v423 = vpop.xlane.xlu0 %422
    %424 = vadd.xlane.f32.xlu0 %v365
    %v425 = vpop.xlane.xlu0 %424
    %426 = vadd.xlane.f32.xlu0 %v366
    %v427 = vpop.xlane.xlu0 %426
    %428 = vadd.xlane.f32.xlu0 %v367
    %v429 = vpop.xlane.xlu0 %428
    %430 = vadd.xlane.f32.xlu0 %v368
    %v431 = vpop.xlane.xlu0 %430
    %432 = vadd.xlane.f32.xlu0 %v369
    %v433 = vpop.xlane.xlu0 %432
    %v434 = vrot.slane %v371, 4
    %v435 = vmax.f32 %v371, %v434
    %v436 = vrot.slane %v435, 2
    %v437 = vmax.f32 %v435, %v436
    %v438 = vrot.slane %v437, 1
    %v439 = vmax.f32 %v437, %v438
    %v440 = vrot.slane %v373, 4
    %v441 = vmax.f32 %v373, %v440
    %v442 = vrot.slane %v441, 2
    %v443 = vmax.f32 %v441, %v442
    %v444 = vrot.slane %v443, 1
    %v445 = vmax.f32 %v443, %v444
    %v446 = vrot.slane %v375, 4
    %v447 = vmax.f32 %v375, %v446
    %v448 = vrot.slane %v447, 2
    %v449 = vmax.f32 %v447, %v448
    %v450 = vrot.slane %v449, 1
    %v451 = vmax.f32 %v449, %v450
    %v452 = vrot.slane %v377, 4
    %v453 = vmax.f32 %v377, %v452
    %v454 = vrot.slane %v453, 2
    %v455 = vmax.f32 %v453, %v454
    %v456 = vrot.slane %v455, 1
    %v457 = vmax.f32 %v455, %v456
    %v458 = vrot.slane %v379, 4
    %v459 = vmax.f32 %v379, %v458
    %v460 = vrot.slane %v459, 2
    %v461 = vmax.f32 %v459, %v460
    %v462 = vrot.slane %v461, 1
    %v463 = vmax.f32 %v461, %v462
    %v464 = vrot.slane %v381, 4
    %v465 = vmax.f32 %v381, %v464
    %v466 = vrot.slane %v465, 2
    %v467 = vmax.f32 %v465, %v466
    %v468 = vrot.slane %v467, 1
    %v469 = vmax.f32 %v467, %v468
    %v470 = vrot.slane %v383, 4
    %v471 = vmax.f32 %v383, %v470
    %v472 = vrot.slane %v471, 2
    %v473 = vmax.f32 %v471, %v472
    %v474 = vrot.slane %v473, 1
    %v475 = vmax.f32 %v473, %v474
    %v476 = vrot.slane %v385, 4
    %v477 = vmax.f32 %v385, %v476
    %v478 = vrot.slane %v477, 2
    %v479 = vmax.f32 %v477, %v478
    %v480 = vrot.slane %v479, 1
    %v481 = vmax.f32 %v479, %v480
    %v482 = vrot.slane %v387, 4
    %v483 = vmax.f32 %v387, %v482
    %v484 = vrot.slane %v483, 2
    %v485 = vmax.f32 %v483, %v484
    %v486 = vrot.slane %v485, 1
    %v487 = vmax.f32 %v485, %v486
    %v488 = vrot.slane %v389, 4
    %v489 = vmax.f32 %v389, %v488
    %v490 = vrot.slane %v489, 2
    %v491 = vmax.f32 %v489, %v490
    %v492 = vrot.slane %v491, 1
    %v493 = vmax.f32 %v491, %v492
    %v494 = vrot.slane %v391, 4
    %v495 = vmax.f32 %v391, %v494
    %v496 = vrot.slane %v495, 2
    %v497 = vmax.f32 %v495, %v496
    %v498 = vrot.slane %v497, 1
    %v499 = vmax.f32 %v497, %v498
    %v500 = vrot.slane %v393, 4
    %v501 = vmax.f32 %v393, %v500
    %v502 = vrot.slane %v501, 2
    %v503 = vmax.f32 %v501, %v502
    %v504 = vrot.slane %v503, 1
    %v505 = vmax.f32 %v503, %v504
    %v506 = vrot.slane %v395, 4
    %v507 = vmax.f32 %v395, %v506
    %v508 = vrot.slane %v507, 2
    %v509 = vmax.f32 %v507, %v508
    %v510 = vrot.slane %v509, 1
    %v511 = vmax.f32 %v509, %v510
    %v512 = vrot.slane %v397, 4
    %v513 = vmax.f32 %v397, %v512
    %v514 = vrot.slane %v513, 2
    %v515 = vmax.f32 %v513, %v514
    %v516 = vrot.slane %v515, 1
    %v517 = vmax.f32 %v515, %v516
    %v518 = vrot.slane %v399, 4
    %v519 = vmax.f32 %v399, %v518
    %v520 = vrot.slane %v519, 2
    %v521 = vmax.f32 %v519, %v520
    %v522 = vrot.slane %v521, 1
    %v523 = vmax.f32 %v521, %v522
    %v524 = vrot.slane %v401, 4
    %v525 = vmax.f32 %v401, %v524
    %v526 = vrot.slane %v525, 2
    %v527 = vmax.f32 %v525, %v526
    %v528 = vrot.slane %v527, 1
    %v529 = vmax.f32 %v527, %v528
    %v530 = vrot.slane %v403, 4
    %v531 = vmax.f32 %v403, %v530
    %v532 = vrot.slane %v531, 2
    %v533 = vmax.f32 %v531, %v532
    %v534 = vrot.slane %v533, 1
    %v535 = vmax.f32 %v533, %v534
    %v536 = vrot.slane %v405, 4
    %v537 = vmax.f32 %v405, %v536
    %v538 = vrot.slane %v537, 2
    %v539 = vmax.f32 %v537, %v538
    %v540 = vrot.slane %v539, 1
    %v541 = vmax.f32 %v539, %v540
    %v542 = vrot.slane %v407, 4
    %v543 = vmax.f32 %v407, %v542
    %v544 = vrot.slane %v543, 2
    %v545 = vmax.f32 %v543, %v544
    %v546 = vrot.slane %v545, 1
    %v547 = vmax.f32 %v545, %v546
    %v548 = vrot.slane %v409, 4
    %v549 = vmax.f32 %v409, %v548
    %v550 = vrot.slane %v549, 2
    %v551 = vmax.f32 %v549, %v550
    %v552 = vrot.slane %v551, 1
    %v553 = vmax.f32 %v551, %v552
    %v554 = vrot.slane %v411, 4
    %v555 = vmax.f32 %v411, %v554
    %v556 = vrot.slane %v555, 2
    %v557 = vmax.f32 %v555, %v556
    %v558 = vrot.slane %v557, 1
    %v559 = vmax.f32 %v557, %v558
    %v560 = vrot.slane %v413, 4
    %v561 = vmax.f32 %v413, %v560
    %v562 = vrot.slane %v561, 2
    %v563 = vmax.f32 %v561, %v562
    %v564 = vrot.slane %v563, 1
    %v565 = vmax.f32 %v563, %v564
    %v566 = vrot.slane %v415, 4
    %v567 = vmax.f32 %v415, %v566
    %v568 = vrot.slane %v567, 2
    %v569 = vmax.f32 %v567, %v568
    %v570 = vrot.slane %v569, 1
    %v571 = vmax.f32 %v569, %v570
    %v572 = vrot.slane %v417, 4
    %v573 = vmax.f32 %v417, %v572
    %v574 = vrot.slane %v573, 2
    %v575 = vmax.f32 %v573, %v574
    %v576 = vrot.slane %v575, 1
    %v577 = vmax.f32 %v575, %v576
    %v578 = vrot.slane %v419, 4
    %v579 = vmax.f32 %v419, %v578
    %v580 = vrot.slane %v579, 2
    %v581 = vmax.f32 %v579, %v580
    %v582 = vrot.slane %v581, 1
    %v583 = vmax.f32 %v581, %v582
    %v584 = vrot.slane %v421, 4
    %v585 = vmax.f32 %v421, %v584
    %v586 = vrot.slane %v585, 2
    %v587 = vmax.f32 %v585, %v586
    %v588 = vrot.slane %v587, 1
    %v589 = vmax.f32 %v587, %v588
    %v590 = vrot.slane %v423, 4
    %v591 = vmax.f32 %v423, %v590
    %v592 = vrot.slane %v591, 2
    %v593 = vmax.f32 %v591, %v592
    %v594 = vrot.slane %v593, 1
    %v595 = vmax.f32 %v593, %v594
    %v596 = vrot.slane %v425, 4
    %v597 = vmax.f32 %v425, %v596
    %v598 = vrot.slane %v597, 2
    %v599 = vmax.f32 %v597, %v598
    %v600 = vrot.slane %v599, 1
    %v601 = vmax.f32 %v599, %v600
    %v602 = vrot.slane %v427, 4
    %v603 = vmax.f32 %v427, %v602
    %v604 = vrot.slane %v603, 2
    %v605 = vmax.f32 %v603, %v604
    %v606 = vrot.slane %v605, 1
    %v607 = vmax.f32 %v605, %v606
    %v608 = vrot.slane %v429, 4
    %v609 = vmax.f32 %v429, %v608
    %v610 = vrot.slane %v609, 2
    %v611 = vmax.f32 %v609, %v610
    %v612 = vrot.slane %v611, 1
    %v613 = vmax.f32 %v611, %v612
    %v614 = vrot.slane %v431, 4
    %v615 = vmax.f32 %v431, %v614
    %v616 = vrot.slane %v615, 2
    %v617 = vmax.f32 %v615, %v616
    %v618 = vrot.slane %v617, 1
    %v619 = vmax.f32 %v617, %v618
    %v620 = vrot.slane %v433, 4
    %v621 = vmax.f32 %v433, %v620
    %v622 = vrot.slane %v621, 2
    %v623 = vmax.f32 %v621, %v622
    %v624 = vrot.slane %v623, 1
    %v625 = vmax.f32 %v623, %v624
    %v626 = vsub.f32 %v371, %v439
    %v627 = vsub.f32 %v373, %v445
    %v628 = vsub.f32 %v375, %v451
    %v629 = vsub.f32 %v377, %v457
    %v630 = vsub.f32 %v379, %v463
    %v631 = vsub.f32 %v381, %v469
    %v632 = vsub.f32 %v383, %v475
    %v633 = vsub.f32 %v385, %v481
    %v634 = vsub.f32 %v387, %v487
    %v635 = vsub.f32 %v389, %v493
    %v636 = vsub.f32 %v391, %v499
    %v637 = vsub.f32 %v393, %v505
    %v638 = vsub.f32 %v395, %v511
    %v639 = vsub.f32 %v397, %v517
    %v640 = vsub.f32 %v399, %v523
    %v641 = vsub.f32 %v401, %v529
    %v642 = vsub.f32 %v403, %v535
    %v643 = vsub.f32 %v405, %v541
    %v644 = vsub.f32 %v407, %v547
    %v645 = vsub.f32 %v409, %v553
    %v646 = vsub.f32 %v411, %v559
    %v647 = vsub.f32 %v413, %v565
    %v648 = vsub.f32 %v415, %v571
    %v649 = vsub.f32 %v417, %v577
    %v650 = vsub.f32 %v419, %v583
    %v651 = vsub.f32 %v421, %v589
    %v652 = vsub.f32 %v423, %v595
    %v653 = vsub.f32 %v425, %v601
    %v654 = vsub.f32 %v427, %v607
    %v655 = vsub.f32 %v429, %v613
    %v656 = vsub.f32 %v431, %v619
    %v657 = vsub.f32 %v433, %v625
    %v658 = vmul.f32 %v626, 1.442695
    %v659 = vpow.pop %v658
    %v660 = vmul.f32 %v627, 1.442695
    %v661 = vpow.pop %v660
    %v662 = vmul.f32 %v628, 1.442695
    %v663 = vpow.pop %v662
    %v664 = vmul.f32 %v629, 1.442695
    %v665 = vpow.pop %v664
    %v666 = vmul.f32 %v630, 1.442695
    %v667 = vpow.pop %v666
    %v668 = vmul.f32 %v631, 1.442695
    %v669 = vpow.pop %v668
    %v670 = vmul.f32 %v632, 1.442695
    %v671 = vpow.pop %v670
    %v672 = vmul.f32 %v633, 1.442695
    %v673 = vpow.pop %v672
    %v674 = vmul.f32 %v634, 1.442695
    %v675 = vpow.pop %v674
    %v676 = vmul.f32 %v635, 1.442695
    %v677 = vpow.pop %v676
    %v678 = vmul.f32 %v636, 1.442695
    %v679 = vpow.pop %v678
    %v680 = vmul.f32 %v637, 1.442695
    %v681 = vpow.pop %v680
    %v682 = vmul.f32 %v638, 1.442695
    %v683 = vpow.pop %v682
    %v684 = vmul.f32 %v639, 1.442695
    %v685 = vpow.pop %v684
    %v686 = vmul.f32 %v640, 1.442695
    %v687 = vpow.pop %v686
    %v688 = vmul.f32 %v641, 1.442695
    %v689 = vpow.pop %v688
    %v690 = vmul.f32 %v642, 1.442695
    %v691 = vpow.pop %v690
    %v692 = vmul.f32 %v643, 1.442695
    %v693 = vpow.pop %v692
    %v694 = vmul.f32 %v644, 1.442695
    %v695 = vpow.pop %v694
    %v696 = vmul.f32 %v645, 1.442695
    %v697 = vpow.pop %v696
    %v698 = vmul.f32 %v646, 1.442695
    %v699 = vpow.pop %v698
    %v700 = vmul.f32 %v647, 1.442695
    %v701 = vpow.pop %v700
    %v702 = vmul.f32 %v648, 1.442695
    %v703 = vpow.pop %v702
    %v704 = vmul.f32 %v649, 1.442695
    %v705 = vpow.pop %v704
    %v706 = vmul.f32 %v650, 1.442695
    %v707 = vpow.pop %v706
    %v708 = vmul.f32 %v651, 1.442695
    %v709 = vpow.pop %v708
    %v710 = vmul.f32 %v652, 1.442695
    %v711 = vpow.pop %v710
    %v712 = vmul.f32 %v653, 1.442695
    %v713 = vpow.pop %v712
    %v714 = vmul.f32 %v654, 1.442695
    %v715 = vpow.pop %v714
    %v716 = vmul.f32 %v655, 1.442695
    %v717 = vpow.pop %v716
    %v718 = vmul.f32 %v656, 1.442695
    %v719 = vpow.pop %v718
    %v720 = vmul.f32 %v657, 1.442695
    %v721 = vpow.pop %v720
    %v722 = vrot.slane %v659, 4
    %v723 = vadd.f32 %v659, %v722
    %v724 = vrot.slane %v723, 2
    %v725 = vadd.f32 %v723, %v724
    %v726 = vrot.slane %v725, 1
    %v727 = vadd.f32 %v725, %v726
    %v728 = vrot.slane %v661, 4
    %v729 = vadd.f32 %v661, %v728
    %v730 = vrot.slane %v729, 2
    %v731 = vadd.f32 %v729, %v730
    %v732 = vrot.slane %v731, 1
    %v733 = vadd.f32 %v731, %v732
    %v734 = vrot.slane %v663, 4
    %v735 = vadd.f32 %v663, %v734
    %v736 = vrot.slane %v735, 2
    %v737 = vadd.f32 %v735, %v736
    %v738 = vrot.slane %v737, 1
    %v739 = vadd.f32 %v737, %v738
    %v740 = vrot.slane %v665, 4
    %v741 = vadd.f32 %v665, %v740
    %v742 = vrot.slane %v741, 2
    %v743 = vadd.f32 %v741, %v742
    %v744 = vrot.slane %v743, 1
    %v745 = vadd.f32 %v743, %v744
    %v746 = vrot.slane %v667, 4
    %v747 = vadd.f32 %v667, %v746
    %v748 = vrot.slane %v747, 2
    %v749 = vadd.f32 %v747, %v748
    %v750 = vrot.slane %v749, 1
    %v751 = vadd.f32 %v749, %v750
    %v752 = vrot.slane %v669, 4
    %v753 = vadd.f32 %v669, %v752
    %v754 = vrot.slane %v753, 2
    %v755 = vadd.f32 %v753, %v754
    %v756 = vrot.slane %v755, 1
    %v757 = vadd.f32 %v755, %v756
    %v758 = vrot.slane %v671, 4
    %v759 = vadd.f32 %v671, %v758
    %v760 = vrot.slane %v759, 2
    %v761 = vadd.f32 %v759, %v760
    %v762 = vrot.slane %v761, 1
    %v763 = vadd.f32 %v761, %v762
    %v764 = vrot.slane %v673, 4
    %v765 = vadd.f32 %v673, %v764
    %v766 = vrot.slane %v765, 2
    %v767 = vadd.f32 %v765, %v766
    %v768 = vrot.slane %v767, 1
    %v769 = vadd.f32 %v767, %v768
    %v770 = vrot.slane %v675, 4
    %v771 = vadd.f32 %v675, %v770
    %v772 = vrot.slane %v771, 2
    %v773 = vadd.f32 %v771, %v772
    %v774 = vrot.slane %v773, 1
    %v775 = vadd.f32 %v773, %v774
    %v776 = vrot.slane %v677, 4
    %v777 = vadd.f32 %v677, %v776
    %v778 = vrot.slane %v777, 2
    %v779 = vadd.f32 %v777, %v778
    %v780 = vrot.slane %v779, 1
    %v781 = vadd.f32 %v779, %v780
    %v782 = vrot.slane %v679, 4
    %v783 = vadd.f32 %v679, %v782
    %v784 = vrot.slane %v783, 2
    %v785 = vadd.f32 %v783, %v784
    %v786 = vrot.slane %v785, 1
    %v787 = vadd.f32 %v785, %v786
    %v788 = vrot.slane %v681, 4
    %v789 = vadd.f32 %v681, %v788
    %v790 = vrot.slane %v789, 2
    %v791 = vadd.f32 %v789, %v790
    %v792 = vrot.slane %v791, 1
    %v793 = vadd.f32 %v791, %v792
    %v794 = vrot.slane %v683, 4
    %v795 = vadd.f32 %v683, %v794
    %v796 = vrot.slane %v795, 2
    %v797 = vadd.f32 %v795, %v796
    %v798 = vrot.slane %v797, 1
    %v799 = vadd.f32 %v797, %v798
    %v800 = vrot.slane %v685, 4
    %v801 = vadd.f32 %v685, %v800
    %v802 = vrot.slane %v801, 2
    %v803 = vadd.f32 %v801, %v802
    %v804 = vrot.slane %v803, 1
    %v805 = vadd.f32 %v803, %v804
    %v806 = vrot.slane %v687, 4
    %v807 = vadd.f32 %v687, %v806
    %v808 = vrot.slane %v807, 2
    %v809 = vadd.f32 %v807, %v808
    %v810 = vrot.slane %v809, 1
    %v811 = vadd.f32 %v809, %v810
    %v812 = vrot.slane %v689, 4
    %v813 = vadd.f32 %v689, %v812
    %v814 = vrot.slane %v813, 2
    %v815 = vadd.f32 %v813, %v814
    %v816 = vrot.slane %v815, 1
    %v817 = vadd.f32 %v815, %v816
    %v818 = vrot.slane %v691, 4
    %v819 = vadd.f32 %v691, %v818
    %v820 = vrot.slane %v819, 2
    %v821 = vadd.f32 %v819, %v820
    %v822 = vrot.slane %v821, 1
    %v823 = vadd.f32 %v821, %v822
    %v824 = vrot.slane %v693, 4
    %v825 = vadd.f32 %v693, %v824
    %v826 = vrot.slane %v825, 2
    %v827 = vadd.f32 %v825, %v826
    %v828 = vrot.slane %v827, 1
    %v829 = vadd.f32 %v827, %v828
    %v830 = vrot.slane %v695, 4
    %v831 = vadd.f32 %v695, %v830
    %v832 = vrot.slane %v831, 2
    %v833 = vadd.f32 %v831, %v832
    %v834 = vrot.slane %v833, 1
    %v835 = vadd.f32 %v833, %v834
    %v836 = vrot.slane %v697, 4
    %v837 = vadd.f32 %v697, %v836
    %v838 = vrot.slane %v837, 2
    %v839 = vadd.f32 %v837, %v838
    %v840 = vrot.slane %v839, 1
    %v841 = vadd.f32 %v839, %v840
    %v842 = vrot.slane %v699, 4
    %v843 = vadd.f32 %v699, %v842
    %v844 = vrot.slane %v843, 2
    %v845 = vadd.f32 %v843, %v844
    %v846 = vrot.slane %v845, 1
    %v847 = vadd.f32 %v845, %v846
    %v848 = vrot.slane %v701, 4
    %v849 = vadd.f32 %v701, %v848
    %v850 = vrot.slane %v849, 2
    %v851 = vadd.f32 %v849, %v850
    %v852 = vrot.slane %v851, 1
    %v853 = vadd.f32 %v851, %v852
    %v854 = vrot.slane %v703, 4
    %v855 = vadd.f32 %v703, %v854
    %v856 = vrot.slane %v855, 2
    %v857 = vadd.f32 %v855, %v856
    %v858 = vrot.slane %v857, 1
    %v859 = vadd.f32 %v857, %v858
    %v860 = vrot.slane %v705, 4
    %v861 = vadd.f32 %v705, %v860
    %v862 = vrot.slane %v861, 2
    %v863 = vadd.f32 %v861, %v862
    %v864 = vrot.slane %v863, 1
    %v865 = vadd.f32 %v863, %v864
    %v866 = vrot.slane %v707, 4
    %v867 = vadd.f32 %v707, %v866
    %v868 = vrot.slane %v867, 2
    %v869 = vadd.f32 %v867, %v868
    %v870 = vrot.slane %v869, 1
    %v871 = vadd.f32 %v869, %v870
    %v872 = vrot.slane %v709, 4
    %v873 = vadd.f32 %v709, %v872
    %v874 = vrot.slane %v873, 2
    %v875 = vadd.f32 %v873, %v874
    %v876 = vrot.slane %v875, 1
    %v877 = vadd.f32 %v875, %v876
    %v878 = vrot.slane %v711, 4
    %v879 = vadd.f32 %v711, %v878
    %v880 = vrot.slane %v879, 2
    %v881 = vadd.f32 %v879, %v880
    %v882 = vrot.slane %v881, 1
    %v883 = vadd.f32 %v881, %v882
    %v884 = vrot.slane %v713, 4
    %v885 = vadd.f32 %v713, %v884
    %v886 = vrot.slane %v885, 2
    %v887 = vadd.f32 %v885, %v886
    %v888 = vrot.slane %v887, 1
    %v889 = vadd.f32 %v887, %v888
    %v890 = vrot.slane %v715, 4
    %v891 = vadd.f32 %v715, %v890
    %v892 = vrot.slane %v891, 2
    %v893 = vadd.f32 %v891, %v892
    %v894 = vrot.slane %v893, 1
    %v895 = vadd.f32 %v893, %v894
    %v896 = vrot.slane %v717, 4
    %v897 = vadd.f32 %v717, %v896
    %v898 = vrot.slane %v897, 2
    %v899 = vadd.f32 %v897, %v898
    %v900 = vrot.slane %v899, 1
    %v901 = vadd.f32 %v899, %v900
    %v902 = vrot.slane %v719, 4
    %v903 = vadd.f32 %v719, %v902
    %v904 = vrot.slane %v903, 2
    %v905 = vadd.f32 %v903, %v904
    %v906 = vrot.slane %v905, 1
    %v907 = vadd.f32 %v905, %v906
    %v908 = vrot.slane %v721, 4
    %v909 = vadd.f32 %v721, %v908
    %v910 = vrot.slane %v909, 2
    %v911 = vadd.f32 %v909, %v910
    %v912 = vrot.slane %v911, 1
    %v913 = vadd.f32 %v911, %v912
    %v914 = vrcp.pop %v727
    %v915 = vmul.f32 %v727, %v914
    %v916 = vsub.f32 1.0, %v915
    %v917 = vmul.f32 %v914, %v916
    %v918 = vadd.f32 %v914, %v917
    %vm919 = vweird.f32 %v727
    %vm920 = vweird.f32 %v914
    %vm921 = vmor %vm919, %vm920
    %v922 = vsel %vm921, %v914, %v918
    %v923 = vand.u32 2147483647, %v727
    %vm924 = vcmp.eq.f32.partialorder %v923, 8.507059e+37
    %v925 = vand.u32 %v727, 2147483648
    %v926 = vor.u32 1.1754944e-38, %v925
    %v927 = vsel %vm924, %v926, %v922
    %v928 = vmul.f32 1.0, %v927
    %v929 = vrcp.pop %v733
    %v930 = vmul.f32 %v733, %v929
    %v931 = vsub.f32 1.0, %v930
    %v932 = vmul.f32 %v929, %v931
    %v933 = vadd.f32 %v929, %v932
    %vm934 = vweird.f32 %v733
    %vm935 = vweird.f32 %v929
    %vm936 = vmor %vm934, %vm935
    %v937 = vsel %vm936, %v929, %v933
    %v938 = vand.u32 2147483647, %v733
    %vm939 = vcmp.eq.f32.partialorder %v938, 8.507059e+37
    %v940 = vand.u32 %v733, 2147483648
    %v941 = vor.u32 1.1754944e-38, %v940
    %v942 = vsel %vm939, %v941, %v937
    %v943 = vmul.f32 1.0, %v942
    %v944 = vrcp.pop %v739
    %v945 = vmul.f32 %v739, %v944
    %v946 = vsub.f32 1.0, %v945
    %v947 = vmul.f32 %v944, %v946
    %v948 = vadd.f32 %v944, %v947
    %vm949 = vweird.f32 %v739
    %vm950 = vweird.f32 %v944
    %vm951 = vmor %vm949, %vm950
    %v952 = vsel %vm951, %v944, %v948
    %v953 = vand.u32 2147483647, %v739
    %vm954 = vcmp.eq.f32.partialorder %v953, 8.507059e+37
    %v955 = vand.u32 %v739, 2147483648
    %v956 = vor.u32 1.1754944e-38, %v955
    %v957 = vsel %vm954, %v956, %v952
    %v958 = vmul.f32 1.0, %v957
    %v959 = vrcp.pop %v745
    %v960 = vmul.f32 %v745, %v959
    %v961 = vsub.f32 1.0, %v960
    %v962 = vmul.f32 %v959, %v961
    %v963 = vadd.f32 %v959, %v962
    %vm964 = vweird.f32 %v745
    %vm965 = vweird.f32 %v959
    %vm966 = vmor %vm964, %vm965
    %v967 = vsel %vm966, %v959, %v963
    %v968 = vand.u32 2147483647, %v745
    %vm969 = vcmp.eq.f32.partialorder %v968, 8.507059e+37
    %v970 = vand.u32 %v745, 2147483648
    %v971 = vor.u32 1.1754944e-38, %v970
    %v972 = vsel %vm969, %v971, %v967
    %v973 = vmul.f32 1.0, %v972
    %v974 = vrcp.pop %v751
    %v975 = vmul.f32 %v751, %v974
    %v976 = vsub.f32 1.0, %v975
    %v977 = vmul.f32 %v974, %v976
    %v978 = vadd.f32 %v974, %v977
    %vm979 = vweird.f32 %v751
    %vm980 = vweird.f32 %v974
    %vm981 = vmor %vm979, %vm980
    %v982 = vsel %vm981, %v974, %v978
    %v983 = vand.u32 2147483647, %v751
    %vm984 = vcmp.eq.f32.partialorder %v983, 8.507059e+37
    %v985 = vand.u32 %v751, 2147483648
    %v986 = vor.u32 1.1754944e-38, %v985
    %v987 = vsel %vm984, %v986, %v982
    %v988 = vmul.f32 1.0, %v987
    %v989 = vrcp.pop %v757
    %v990 = vmul.f32 %v757, %v989
    %v991 = vsub.f32 1.0, %v990
    %v992 = vmul.f32 %v989, %v991
    %v993 = vadd.f32 %v989, %v992
    %vm994 = vweird.f32 %v757
    %vm995 = vweird.f32 %v989
    %vm996 = vmor %vm994, %vm995
    %v997 = vsel %vm996, %v989, %v993
    %v998 = vand.u32 2147483647, %v757
    %vm999 = vcmp.eq.f32.partialorder %v998, 8.507059e+37
    %v1000 = vand.u32 %v757, 2147483648
    %v1001 = vor.u32 1.1754944e-38, %v1000
    %v1002 = vsel %vm999, %v1001, %v997
    %v1003 = vmul.f32 1.0, %v1002
    %v1004 = vrcp.pop %v763
    %v1005 = vmul.f32 %v763, %v1004
    %v1006 = vsub.f32 1.0, %v1005
    %v1007 = vmul.f32 %v1004, %v1006
    %v1008 = vadd.f32 %v1004, %v1007
    %vm1009 = vweird.f32 %v763
    %vm1010 = vweird.f32 %v1004
    %vm1011 = vmor %vm1009, %vm1010
    %v1012 = vsel %vm1011, %v1004, %v1008
    %v1013 = vand.u32 2147483647, %v763
    %vm1014 = vcmp.eq.f32.partialorder %v1013, 8.507059e+37
    %v1015 = vand.u32 %v763, 2147483648
    %v1016 = vor.u32 1.1754944e-38, %v1015
    %v1017 = vsel %vm1014, %v1016, %v1012
    %v1018 = vmul.f32 1.0, %v1017
    %v1019 = vrcp.pop %v769
    %v1020 = vmul.f32 %v769, %v1019
    %v1021 = vsub.f32 1.0, %v1020
    %v1022 = vmul.f32 %v1019, %v1021
    %v1023 = vadd.f32 %v1019, %v1022
    %vm1024 = vweird.f32 %v769
    %vm1025 = vweird.f32 %v1019
    %vm1026 = vmor %vm1024, %vm1025
    %v1027 = vsel %vm1026, %v1019, %v1023
    %v1028 = vand.u32 2147483647, %v769
    %vm1029 = vcmp.eq.f32.partialorder %v1028, 8.507059e+37
    %v1030 = vand.u32 %v769, 2147483648
    %v1031 = vor.u32 1.1754944e-38, %v1030
    %v1032 = vsel %vm1029, %v1031, %v1027
    %v1033 = vmul.f32 1.0, %v1032
    %v1034 = vrcp.pop %v775
    %v1035 = vmul.f32 %v775, %v1034
    %v1036 = vsub.f32 1.0, %v1035
    %v1037 = vmul.f32 %v1034, %v1036
    %v1038 = vadd.f32 %v1034, %v1037
    %vm1039 = vweird.f32 %v775
    %vm1040 = vweird.f32 %v1034
    %vm1041 = vmor %vm1039, %vm1040
    %v1042 = vsel %vm1041, %v1034, %v1038
    %v1043 = vand.u32 2147483647, %v775
    %vm1044 = vcmp.eq.f32.partialorder %v1043, 8.507059e+37
    %v1045 = vand.u32 %v775, 2147483648
    %v1046 = vor.u32 1.1754944e-38, %v1045
    %v1047 = vsel %vm1044, %v1046, %v1042
    %v1048 = vmul.f32 1.0, %v1047
    %v1049 = vrcp.pop %v781
    %v1050 = vmul.f32 %v781, %v1049
    %v1051 = vsub.f32 1.0, %v1050
    %v1052 = vmul.f32 %v1049, %v1051
    %v1053 = vadd.f32 %v1049, %v1052
    %vm1054 = vweird.f32 %v781
    %vm1055 = vweird.f32 %v1049
    %vm1056 = vmor %vm1054, %vm1055
    %v1057 = vsel %vm1056, %v1049, %v1053
    %v1058 = vand.u32 2147483647, %v781
    %vm1059 = vcmp.eq.f32.partialorder %v1058, 8.507059e+37
    %v1060 = vand.u32 %v781, 2147483648
    %v1061 = vor.u32 1.1754944e-38, %v1060
    %v1062 = vsel %vm1059, %v1061, %v1057
    %v1063 = vmul.f32 1.0, %v1062
    %v1064 = vrcp.pop %v787
    %v1065 = vmul.f32 %v787, %v1064
    %v1066 = vsub.f32 1.0, %v1065
    %v1067 = vmul.f32 %v1064, %v1066
    %v1068 = vadd.f32 %v1064, %v1067
    %vm1069 = vweird.f32 %v787
    %vm1070 = vweird.f32 %v1064
    %vm1071 = vmor %vm1069, %vm1070
    %v1072 = vsel %vm1071, %v1064, %v1068
    %v1073 = vand.u32 2147483647, %v787
    %vm1074 = vcmp.eq.f32.partialorder %v1073, 8.507059e+37
    %v1075 = vand.u32 %v787, 2147483648
    %v1076 = vor.u32 1.1754944e-38, %v1075
    %v1077 = vsel %vm1074, %v1076, %v1072
    %v1078 = vmul.f32 1.0, %v1077
    %v1079 = vrcp.pop %v793
    %v1080 = vmul.f32 %v793, %v1079
    %v1081 = vsub.f32 1.0, %v1080
    %v1082 = vmul.f32 %v1079, %v1081
    %v1083 = vadd.f32 %v1079, %v1082
    %vm1084 = vweird.f32 %v793
    %vm1085 = vweird.f32 %v1079
    %vm1086 = vmor %vm1084, %vm1085
    %v1087 = vsel %vm1086, %v1079, %v1083
    %v1088 = vand.u32 2147483647, %v793
    %vm1089 = vcmp.eq.f32.partialorder %v1088, 8.507059e+37
    %v1090 = vand.u32 %v793, 2147483648
    %v1091 = vor.u32 1.1754944e-38, %v1090
    %v1092 = vsel %vm1089, %v1091, %v1087
    %v1093 = vmul.f32 1.0, %v1092
    %v1094 = vrcp.pop %v799
    %v1095 = vmul.f32 %v799, %v1094
    %v1096 = vsub.f32 1.0, %v1095
    %v1097 = vmul.f32 %v1094, %v1096
    %v1098 = vadd.f32 %v1094, %v1097
    %vm1099 = vweird.f32 %v799
    %vm1100 = vweird.f32 %v1094
    %vm1101 = vmor %vm1099, %vm1100
    %v1102 = vsel %vm1101, %v1094, %v1098
    %v1103 = vand.u32 2147483647, %v799
    %vm1104 = vcmp.eq.f32.partialorder %v1103, 8.507059e+37
    %v1105 = vand.u32 %v799, 2147483648
    %v1106 = vor.u32 1.1754944e-38, %v1105
    %v1107 = vsel %vm1104, %v1106, %v1102
    %v1108 = vmul.f32 1.0, %v1107
    %v1109 = vrcp.pop %v805
    %v1110 = vmul.f32 %v805, %v1109
    %v1111 = vsub.f32 1.0, %v1110
    %v1112 = vmul.f32 %v1109, %v1111
    %v1113 = vadd.f32 %v1109, %v1112
    %vm1114 = vweird.f32 %v805
    %vm1115 = vweird.f32 %v1109
    %vm1116 = vmor %vm1114, %vm1115
    %v1117 = vsel %vm1116, %v1109, %v1113
    %v1118 = vand.u32 2147483647, %v805
    %vm1119 = vcmp.eq.f32.partialorder %v1118, 8.507059e+37
    %v1120 = vand.u32 %v805, 2147483648
    %v1121 = vor.u32 1.1754944e-38, %v1120
    %v1122 = vsel %vm1119, %v1121, %v1117
    %v1123 = vmul.f32 1.0, %v1122
    %v1124 = vrcp.pop %v811
    %v1125 = vmul.f32 %v811, %v1124
    %v1126 = vsub.f32 1.0, %v1125
    %v1127 = vmul.f32 %v1124, %v1126
    %v1128 = vadd.f32 %v1124, %v1127
    %vm1129 = vweird.f32 %v811
    %vm1130 = vweird.f32 %v1124
    %vm1131 = vmor %vm1129, %vm1130
    %v1132 = vsel %vm1131, %v1124, %v1128
    %v1133 = vand.u32 2147483647, %v811
    %vm1134 = vcmp.eq.f32.partialorder %v1133, 8.507059e+37
    %v1135 = vand.u32 %v811, 2147483648
    %v1136 = vor.u32 1.1754944e-38, %v1135
    %v1137 = vsel %vm1134, %v1136, %v1132
    %v1138 = vmul.f32 1.0, %v1137
    %v1139 = vrcp.pop %v817
    %v1140 = vmul.f32 %v817, %v1139
    %v1141 = vsub.f32 1.0, %v1140
    %v1142 = vmul.f32 %v1139, %v1141
    %v1143 = vadd.f32 %v1139, %v1142
    %vm1144 = vweird.f32 %v817
    %vm1145 = vweird.f32 %v1139
    %vm1146 = vmor %vm1144, %vm1145
    %v1147 = vsel %vm1146, %v1139, %v1143
    %v1148 = vand.u32 2147483647, %v817
    %vm1149 = vcmp.eq.f32.partialorder %v1148, 8.507059e+37
    %v1150 = vand.u32 %v817, 2147483648
    %v1151 = vor.u32 1.1754944e-38, %v1150
    %v1152 = vsel %vm1149, %v1151, %v1147
    %v1153 = vmul.f32 1.0, %v1152
    %v1154 = vrcp.pop %v823
    %v1155 = vmul.f32 %v823, %v1154
    %v1156 = vsub.f32 1.0, %v1155
    %v1157 = vmul.f32 %v1154, %v1156
    %v1158 = vadd.f32 %v1154, %v1157
    %vm1159 = vweird.f32 %v823
    %vm1160 = vweird.f32 %v1154
    %vm1161 = vmor %vm1159, %vm1160
    %v1162 = vsel %vm1161, %v1154, %v1158
    %v1163 = vand.u32 2147483647, %v823
    %vm1164 = vcmp.eq.f32.partialorder %v1163, 8.507059e+37
    %v1165 = vand.u32 %v823, 2147483648
    %v1166 = vor.u32 1.1754944e-38, %v1165
    %v1167 = vsel %vm1164, %v1166, %v1162
    %v1168 = vmul.f32 1.0, %v1167
    %v1169 = vrcp.pop %v829
    %v1170 = vmul.f32 %v829, %v1169
    %v1171 = vsub.f32 1.0, %v1170
    %v1172 = vmul.f32 %v1169, %v1171
    %v1173 = vadd.f32 %v1169, %v1172
    %vm1174 = vweird.f32 %v829
    %vm1175 = vweird.f32 %v1169
    %vm1176 = vmor %vm1174, %vm1175
    %v1177 = vsel %vm1176, %v1169, %v1173
    %v1178 = vand.u32 2147483647, %v829
    %vm1179 = vcmp.eq.f32.partialorder %v1178, 8.507059e+37
    %v1180 = vand.u32 %v829, 2147483648
    %v1181 = vor.u32 1.1754944e-38, %v1180
    %v1182 = vsel %vm1179, %v1181, %v1177
    %v1183 = vmul.f32 1.0, %v1182
    %v1184 = vrcp.pop %v835
    %v1185 = vmul.f32 %v835, %v1184
    %v1186 = vsub.f32 1.0, %v1185
    %v1187 = vmul.f32 %v1184, %v1186
    %v1188 = vadd.f32 %v1184, %v1187
    %vm1189 = vweird.f32 %v835
    %vm1190 = vweird.f32 %v1184
    %vm1191 = vmor %vm1189, %vm1190
    %v1192 = vsel %vm1191, %v1184, %v1188
    %v1193 = vand.u32 2147483647, %v835
    %vm1194 = vcmp.eq.f32.partialorder %v1193, 8.507059e+37
    %v1195 = vand.u32 %v835, 2147483648
    %v1196 = vor.u32 1.1754944e-38, %v1195
    %v1197 = vsel %vm1194, %v1196, %v1192
    %v1198 = vmul.f32 1.0, %v1197
    %v1199 = vrcp.pop %v841
    %v1200 = vmul.f32 %v841, %v1199
    %v1201 = vsub.f32 1.0, %v1200
    %v1202 = vmul.f32 %v1199, %v1201
    %v1203 = vadd.f32 %v1199, %v1202
    %vm1204 = vweird.f32 %v841
    %vm1205 = vweird.f32 %v1199
    %vm1206 = vmor %vm1204, %vm1205
    %v1207 = vsel %vm1206, %v1199, %v1203
    %v1208 = vand.u32 2147483647, %v841
    %vm1209 = vcmp.eq.f32.partialorder %v1208, 8.507059e+37
    %v1210 = vand.u32 %v841, 2147483648
    %v1211 = vor.u32 1.1754944e-38, %v1210
    %v1212 = vsel %vm1209, %v1211, %v1207
    %v1213 = vmul.f32 1.0, %v1212
    %v1214 = vrcp.pop %v847
    %v1215 = vmul.f32 %v847, %v1214
    %v1216 = vsub.f32 1.0, %v1215
    %v1217 = vmul.f32 %v1214, %v1216
    %v1218 = vadd.f32 %v1214, %v1217
    %vm1219 = vweird.f32 %v847
    %vm1220 = vweird.f32 %v1214
    %vm1221 = vmor %vm1219, %vm1220
    %v1222 = vsel %vm1221, %v1214, %v1218
    %v1223 = vand.u32 2147483647, %v847
    %vm1224 = vcmp.eq.f32.partialorder %v1223, 8.507059e+37
    %v1225 = vand.u32 %v847, 2147483648
    %v1226 = vor.u32 1.1754944e-38, %v1225
    %v1227 = vsel %vm1224, %v1226, %v1222
    %v1228 = vmul.f32 1.0, %v1227
    %v1229 = vrcp.pop %v853
    %v1230 = vmul.f32 %v853, %v1229
    %v1231 = vsub.f32 1.0, %v1230
    %v1232 = vmul.f32 %v1229, %v1231
    %v1233 = vadd.f32 %v1229, %v1232
    %vm1234 = vweird.f32 %v853
    %vm1235 = vweird.f32 %v1229
    %vm1236 = vmor %vm1234, %vm1235
    %v1237 = vsel %vm1236, %v1229, %v1233
    %v1238 = vand.u32 2147483647, %v853
    %vm1239 = vcmp.eq.f32.partialorder %v1238, 8.507059e+37
    %v1240 = vand.u32 %v853, 2147483648
    %v1241 = vor.u32 1.1754944e-38, %v1240
    %v1242 = vsel %vm1239, %v1241, %v1237
    %v1243 = vmul.f32 1.0, %v1242
    %v1244 = vrcp.pop %v859
    %v1245 = vmul.f32 %v859, %v1244
    %v1246 = vsub.f32 1.0, %v1245
    %v1247 = vmul.f32 %v1244, %v1246
    %v1248 = vadd.f32 %v1244, %v1247
    %vm1249 = vweird.f32 %v859
    %vm1250 = vweird.f32 %v1244
    %vm1251 = vmor %vm1249, %vm1250
    %v1252 = vsel %vm1251, %v1244, %v1248
    %v1253 = vand.u32 2147483647, %v859
    %vm1254 = vcmp.eq.f32.partialorder %v1253, 8.507059e+37
    %v1255 = vand.u32 %v859, 2147483648
    %v1256 = vor.u32 1.1754944e-38, %v1255
    %v1257 = vsel %vm1254, %v1256, %v1252
    %v1258 = vmul.f32 1.0, %v1257
    %v1259 = vrcp.pop %v865
    %v1260 = vmul.f32 %v865, %v1259
    %v1261 = vsub.f32 1.0, %v1260
    %v1262 = vmul.f32 %v1259, %v1261
    %v1263 = vadd.f32 %v1259, %v1262
    %vm1264 = vweird.f32 %v865
    %vm1265 = vweird.f32 %v1259
    %vm1266 = vmor %vm1264, %vm1265
    %v1267 = vsel %vm1266, %v1259, %v1263
    %v1268 = vand.u32 2147483647, %v865
    %vm1269 = vcmp.eq.f32.partialorder %v1268, 8.507059e+37
    %v1270 = vand.u32 %v865, 2147483648
    %v1271 = vor.u32 1.1754944e-38, %v1270
    %v1272 = vsel %vm1269, %v1271, %v1267
    %v1273 = vmul.f32 1.0, %v1272
    %v1274 = vrcp.pop %v871
    %v1275 = vmul.f32 %v871, %v1274
    %v1276 = vsub.f32 1.0, %v1275
    %v1277 = vmul.f32 %v1274, %v1276
    %v1278 = vadd.f32 %v1274, %v1277
    %vm1279 = vweird.f32 %v871
    %vm1280 = vweird.f32 %v1274
    %vm1281 = vmor %vm1279, %vm1280
    %v1282 = vsel %vm1281, %v1274, %v1278
    %v1283 = vand.u32 2147483647, %v871
    %vm1284 = vcmp.eq.f32.partialorder %v1283, 8.507059e+37
    %v1285 = vand.u32 %v871, 2147483648
    %v1286 = vor.u32 1.1754944e-38, %v1285
    %v1287 = vsel %vm1284, %v1286, %v1282
    %v1288 = vmul.f32 1.0, %v1287
    %v1289 = vrcp.pop %v877
    %v1290 = vmul.f32 %v877, %v1289
    %v1291 = vsub.f32 1.0, %v1290
    %v1292 = vmul.f32 %v1289, %v1291
    %v1293 = vadd.f32 %v1289, %v1292
    %vm1294 = vweird.f32 %v877
    %vm1295 = vweird.f32 %v1289
    %vm1296 = vmor %vm1294, %vm1295
    %v1297 = vsel %vm1296, %v1289, %v1293
    %v1298 = vand.u32 2147483647, %v877
    %vm1299 = vcmp.eq.f32.partialorder %v1298, 8.507059e+37
    %v1300 = vand.u32 %v877, 2147483648
    %v1301 = vor.u32 1.1754944e-38, %v1300
    %v1302 = vsel %vm1299, %v1301, %v1297
    %v1303 = vmul.f32 1.0, %v1302
    %v1304 = vrcp.pop %v883
    %v1305 = vmul.f32 %v883, %v1304
    %v1306 = vsub.f32 1.0, %v1305
    %v1307 = vmul.f32 %v1304, %v1306
    %v1308 = vadd.f32 %v1304, %v1307
    %vm1309 = vweird.f32 %v883
    %vm1310 = vweird.f32 %v1304
    %vm1311 = vmor %vm1309, %vm1310
    %v1312 = vsel %vm1311, %v1304, %v1308
    %v1313 = vand.u32 2147483647, %v883
    %vm1314 = vcmp.eq.f32.partialorder %v1313, 8.507059e+37
    %v1315 = vand.u32 %v883, 2147483648
    %v1316 = vor.u32 1.1754944e-38, %v1315
    %v1317 = vsel %vm1314, %v1316, %v1312
    %v1318 = vmul.f32 1.0, %v1317
    %v1319 = vrcp.pop %v889
    %v1320 = vmul.f32 %v889, %v1319
    %v1321 = vsub.f32 1.0, %v1320
    %v1322 = vmul.f32 %v1319, %v1321
    %v1323 = vadd.f32 %v1319, %v1322
    %vm1324 = vweird.f32 %v889
    %vm1325 = vweird.f32 %v1319
    %vm1326 = vmor %vm1324, %vm1325
    %v1327 = vsel %vm1326, %v1319, %v1323
    %v1328 = vand.u32 2147483647, %v889
    %vm1329 = vcmp.eq.f32.partialorder %v1328, 8.507059e+37
    %v1330 = vand.u32 %v889, 2147483648
    %v1331 = vor.u32 1.1754944e-38, %v1330
    %v1332 = vsel %vm1329, %v1331, %v1327
    %v1333 = vmul.f32 1.0, %v1332
    %v1334 = vrcp.pop %v895
    %v1335 = vmul.f32 %v895, %v1334
    %v1336 = vsub.f32 1.0, %v1335
    %v1337 = vmul.f32 %v1334, %v1336
    %v1338 = vadd.f32 %v1334, %v1337
    %vm1339 = vweird.f32 %v895
    %vm1340 = vweird.f32 %v1334
    %vm1341 = vmor %vm1339, %vm1340
    %v1342 = vsel %vm1341, %v1334, %v1338
    %v1343 = vand.u32 2147483647, %v895
    %vm1344 = vcmp.eq.f32.partialorder %v1343, 8.507059e+37
    %v1345 = vand.u32 %v895, 2147483648
    %v1346 = vor.u32 1.1754944e-38, %v1345
    %v1347 = vsel %vm1344, %v1346, %v1342
    %v1348 = vmul.f32 1.0, %v1347
    %v1349 = vrcp.pop %v901
    %v1350 = vmul.f32 %v901, %v1349
    %v1351 = vsub.f32 1.0, %v1350
    %v1352 = vmul.f32 %v1349, %v1351
    %v1353 = vadd.f32 %v1349, %v1352
    %vm1354 = vweird.f32 %v901
    %vm1355 = vweird.f32 %v1349
    %vm1356 = vmor %vm1354, %vm1355
    %v1357 = vsel %vm1356, %v1349, %v1353
    %v1358 = vand.u32 2147483647, %v901
    %vm1359 = vcmp.eq.f32.partialorder %v1358, 8.507059e+37
    %v1360 = vand.u32 %v901, 2147483648
    %v1361 = vor.u32 1.1754944e-38, %v1360
    %v1362 = vsel %vm1359, %v1361, %v1357
    %v1363 = vmul.f32 1.0, %v1362
    %v1364 = vrcp.pop %v907
    %v1365 = vmul.f32 %v907, %v1364
    %v1366 = vsub.f32 1.0, %v1365
    %v1367 = vmul.f32 %v1364, %v1366
    %v1368 = vadd.f32 %v1364, %v1367
    %vm1369 = vweird.f32 %v907
    %vm1370 = vweird.f32 %v1364
    %vm1371 = vmor %vm1369, %vm1370
    %v1372 = vsel %vm1371, %v1364, %v1368
    %v1373 = vand.u32 2147483647, %v907
    %vm1374 = vcmp.eq.f32.partialorder %v1373, 8.507059e+37
    %v1375 = vand.u32 %v907, 2147483648
    %v1376 = vor.u32 1.1754944e-38, %v1375
    %v1377 = vsel %vm1374, %v1376, %v1372
    %v1378 = vmul.f32 1.0, %v1377
    %v1379 = vrcp.pop %v913
    %v1380 = vmul.f32 %v913, %v1379
    %v1381 = vsub.f32 1.0, %v1380
    %v1382 = vmul.f32 %v1379, %v1381
    %v1383 = vadd.f32 %v1379, %v1382
    %vm1384 = vweird.f32 %v913
    %vm1385 = vweird.f32 %v1379
    %vm1386 = vmor %vm1384, %vm1385
    %v1387 = vsel %vm1386, %v1379, %v1383
    %v1388 = vand.u32 2147483647, %v913
    %vm1389 = vcmp.eq.f32.partialorder %v1388, 8.507059e+37
    %v1390 = vand.u32 %v913, 2147483648
    %v1391 = vor.u32 1.1754944e-38, %v1390
    %v1392 = vsel %vm1389, %v1391, %v1387
    %v1393 = vmul.f32 1.0, %v1392
    %v1394 = vmul.f32 %v659, %v52
    %v1395 = vmul.f32 %v661, %v53
    %v1396 = vmul.f32 %v663, %v54
    %v1397 = vmul.f32 %v665, %v55
    %v1398 = vmul.f32 %v667, %v56
    %v1399 = vmul.f32 %v669, %v57
    %v1400 = vmul.f32 %v671, %v58
    %v1401 = vmul.f32 %v673, %v59
    %v1402 = vmul.f32 %v675, %v60
    %v1403 = vmul.f32 %v677, %v61
    %v1404 = vmul.f32 %v679, %v62
    %v1405 = vmul.f32 %v681, %v63
    %v1406 = vmul.f32 %v683, %v64
    %v1407 = vmul.f32 %v685, %v65
    %v1408 = vmul.f32 %v687, %v66
    %v1409 = vmul.f32 %v689, %v67
    %v1410 = vmul.f32 %v691, %v68
    %v1411 = vmul.f32 %v693, %v69
    %v1412 = vmul.f32 %v695, %v70
    %v1413 = vmul.f32 %v697, %v71
    %v1414 = vmul.f32 %v699, %v72
    %v1415 = vmul.f32 %v701, %v73
    %v1416 = vmul.f32 %v703, %v74
    %v1417 = vmul.f32 %v705, %v75
    %v1418 = vmul.f32 %v707, %v76
    %v1419 = vmul.f32 %v709, %v77
    %v1420 = vmul.f32 %v711, %v78
    %v1421 = vmul.f32 %v713, %v79
    %v1422 = vmul.f32 %v715, %v80
    %v1423 = vmul.f32 %v717, %v81
    %v1424 = vmul.f32 %v719, %v82
    %v1425 = vmul.f32 %v721, %v83
    %v1426 = vsel %vm92, %v1394, 0.0
    %v1427 = vrot.slane %v1426, 4
    %v1428 = vadd.f32 %v1426, %v1427
    %v1429 = vrot.slane %v1428, 2
    %v1430 = vadd.f32 %v1428, %v1429
    %v1431 = vrot.slane %v1430, 1
    %v1432 = vadd.f32 %v1430, %v1431
    %v1433 = vsel %vm92, %v1395, 0.0
    %v1434 = vrot.slane %v1433, 4
    %v1435 = vadd.f32 %v1433, %v1434
    %v1436 = vrot.slane %v1435, 2
    %v1437 = vadd.f32 %v1435, %v1436
    %v1438 = vrot.slane %v1437, 1
    %v1439 = vadd.f32 %v1437, %v1438
    %v1440 = vsel %vm92, %v1396, 0.0
    %v1441 = vrot.slane %v1440, 4
    %v1442 = vadd.f32 %v1440, %v1441
    %v1443 = vrot.slane %v1442, 2
    %v1444 = vadd.f32 %v1442, %v1443
    %v1445 = vrot.slane %v1444, 1
    %v1446 = vadd.f32 %v1444, %v1445
    %v1447 = vsel %vm92, %v1397, 0.0
    %v1448 = vrot.slane %v1447, 4
    %v1449 = vadd.f32 %v1447, %v1448
    %v1450 = vrot.slane %v1449, 2
    %v1451 = vadd.f32 %v1449, %v1450
    %v1452 = vrot.slane %v1451, 1
    %v1453 = vadd.f32 %v1451, %v1452
    %v1454 = vsel %vm92, %v1398, 0.0
    %v1455 = vrot.slane %v1454, 4
    %v1456 = vadd.f32 %v1454, %v1455
    %v1457 = vrot.slane %v1456, 2
    %v1458 = vadd.f32 %v1456, %v1457
    %v1459 = vrot.slane %v1458, 1
    %v1460 = vadd.f32 %v1458, %v1459
    %v1461 = vsel %vm92, %v1399, 0.0
    %v1462 = vrot.slane %v1461, 4
    %v1463 = vadd.f32 %v1461, %v1462
    %v1464 = vrot.slane %v1463, 2
    %v1465 = vadd.f32 %v1463, %v1464
    %v1466 = vrot.slane %v1465, 1
    %v1467 = vadd.f32 %v1465, %v1466
    %v1468 = vsel %vm92, %v1400, 0.0
    %v1469 = vrot.slane %v1468, 4
    %v1470 = vadd.f32 %v1468, %v1469
    %v1471 = vrot.slane %v1470, 2
    %v1472 = vadd.f32 %v1470, %v1471
    %v1473 = vrot.slane %v1472, 1
    %v1474 = vadd.f32 %v1472, %v1473
    %v1475 = vsel %vm92, %v1401, 0.0
    %v1476 = vrot.slane %v1475, 4
    %v1477 = vadd.f32 %v1475, %v1476
    %v1478 = vrot.slane %v1477, 2
    %v1479 = vadd.f32 %v1477, %v1478
    %v1480 = vrot.slane %v1479, 1
    %v1481 = vadd.f32 %v1479, %v1480
    %v1482 = vsel %vm92, %v1402, 0.0
    %v1483 = vrot.slane %v1482, 4
    %v1484 = vadd.f32 %v1482, %v1483
    %v1485 = vrot.slane %v1484, 2
    %v1486 = vadd.f32 %v1484, %v1485
    %v1487 = vrot.slane %v1486, 1
    %v1488 = vadd.f32 %v1486, %v1487
    %v1489 = vsel %vm92, %v1403, 0.0
    %v1490 = vrot.slane %v1489, 4
    %v1491 = vadd.f32 %v1489, %v1490
    %v1492 = vrot.slane %v1491, 2
    %v1493 = vadd.f32 %v1491, %v1492
    %v1494 = vrot.slane %v1493, 1
    %v1495 = vadd.f32 %v1493, %v1494
    %v1496 = vsel %vm92, %v1404, 0.0
    %v1497 = vrot.slane %v1496, 4
    %v1498 = vadd.f32 %v1496, %v1497
    %v1499 = vrot.slane %v1498, 2
    %v1500 = vadd.f32 %v1498, %v1499
    %v1501 = vrot.slane %v1500, 1
    %v1502 = vadd.f32 %v1500, %v1501
    %v1503 = vsel %vm92, %v1405, 0.0
    %v1504 = vrot.slane %v1503, 4
    %v1505 = vadd.f32 %v1503, %v1504
    %v1506 = vrot.slane %v1505, 2
    %v1507 = vadd.f32 %v1505, %v1506
    %v1508 = vrot.slane %v1507, 1
    %v1509 = vadd.f32 %v1507, %v1508
    %v1510 = vsel %vm92, %v1406, 0.0
    %v1511 = vrot.slane %v1510, 4
    %v1512 = vadd.f32 %v1510, %v1511
    %v1513 = vrot.slane %v1512, 2
    %v1514 = vadd.f32 %v1512, %v1513
    %v1515 = vrot.slane %v1514, 1
    %v1516 = vadd.f32 %v1514, %v1515
    %v1517 = vsel %vm92, %v1407, 0.0
    %v1518 = vrot.slane %v1517, 4
    %v1519 = vadd.f32 %v1517, %v1518
    %v1520 = vrot.slane %v1519, 2
    %v1521 = vadd.f32 %v1519, %v1520
    %v1522 = vrot.slane %v1521, 1
    %v1523 = vadd.f32 %v1521, %v1522
    %v1524 = vsel %vm92, %v1408, 0.0
    %v1525 = vrot.slane %v1524, 4
    %v1526 = vadd.f32 %v1524, %v1525
    %v1527 = vrot.slane %v1526, 2
    %v1528 = vadd.f32 %v1526, %v1527
    %v1529 = vrot.slane %v1528, 1
    %v1530 = vadd.f32 %v1528, %v1529
    %v1531 = vsel %vm92, %v1409, 0.0
    %v1532 = vrot.slane %v1531, 4
    %v1533 = vadd.f32 %v1531, %v1532
    %v1534 = vrot.slane %v1533, 2
    %v1535 = vadd.f32 %v1533, %v1534
    %v1536 = vrot.slane %v1535, 1
    %v1537 = vadd.f32 %v1535, %v1536
    %v1538 = vsel %vm92, %v1410, 0.0
    %v1539 = vrot.slane %v1538, 4
    %v1540 = vadd.f32 %v1538, %v1539
    %v1541 = vrot.slane %v1540, 2
    %v1542 = vadd.f32 %v1540, %v1541
    %v1543 = vrot.slane %v1542, 1
    %v1544 = vadd.f32 %v1542, %v1543
    %v1545 = vsel %vm92, %v1411, 0.0
    %v1546 = vrot.slane %v1545, 4
    %v1547 = vadd.f32 %v1545, %v1546
    %v1548 = vrot.slane %v1547, 2
    %v1549 = vadd.f32 %v1547, %v1548
    %v1550 = vrot.slane %v1549, 1
    %v1551 = vadd.f32 %v1549, %v1550
    %v1552 = vsel %vm92, %v1412, 0.0
    %v1553 = vrot.slane %v1552, 4
    %v1554 = vadd.f32 %v1552, %v1553
    %v1555 = vrot.slane %v1554, 2
    %v1556 = vadd.f32 %v1554, %v1555
    %v1557 = vrot.slane %v1556, 1
    %v1558 = vadd.f32 %v1556, %v1557
    %v1559 = vsel %vm92, %v1413, 0.0
    %v1560 = vrot.slane %v1559, 4
    %v1561 = vadd.f32 %v1559, %v1560
    %v1562 = vrot.slane %v1561, 2
    %v1563 = vadd.f32 %v1561, %v1562
    %v1564 = vrot.slane %v1563, 1
    %v1565 = vadd.f32 %v1563, %v1564
    %v1566 = vsel %vm92, %v1414, 0.0
    %v1567 = vrot.slane %v1566, 4
    %v1568 = vadd.f32 %v1566, %v1567
    %v1569 = vrot.slane %v1568, 2
    %v1570 = vadd.f32 %v1568, %v1569
    %v1571 = vrot.slane %v1570, 1
    %v1572 = vadd.f32 %v1570, %v1571
    %v1573 = vsel %vm92, %v1415, 0.0
    %v1574 = vrot.slane %v1573, 4
    %v1575 = vadd.f32 %v1573, %v1574
    %v1576 = vrot.slane %v1575, 2
    %v1577 = vadd.f32 %v1575, %v1576
    %v1578 = vrot.slane %v1577, 1
    %v1579 = vadd.f32 %v1577, %v1578
    %v1580 = vsel %vm92, %v1416, 0.0
    %v1581 = vrot.slane %v1580, 4
    %v1582 = vadd.f32 %v1580, %v1581
    %v1583 = vrot.slane %v1582, 2
    %v1584 = vadd.f32 %v1582, %v1583
    %v1585 = vrot.slane %v1584, 1
    %v1586 = vadd.f32 %v1584, %v1585
    %v1587 = vsel %vm92, %v1417, 0.0
    %v1588 = vrot.slane %v1587, 4
    %v1589 = vadd.f32 %v1587, %v1588
    %v1590 = vrot.slane %v1589, 2
    %v1591 = vadd.f32 %v1589, %v1590
    %v1592 = vrot.slane %v1591, 1
    %v1593 = vadd.f32 %v1591, %v1592
    %v1594 = vsel %vm92, %v1418, 0.0
    %v1595 = vrot.slane %v1594, 4
    %v1596 = vadd.f32 %v1594, %v1595
    %v1597 = vrot.slane %v1596, 2
    %v1598 = vadd.f32 %v1596, %v1597
    %v1599 = vrot.slane %v1598, 1
    %v1600 = vadd.f32 %v1598, %v1599
    %v1601 = vsel %vm92, %v1419, 0.0
    %v1602 = vrot.slane %v1601, 4
    %v1603 = vadd.f32 %v1601, %v1602
    %v1604 = vrot.slane %v1603, 2
    %v1605 = vadd.f32 %v1603, %v1604
    %v1606 = vrot.slane %v1605, 1
    %v1607 = vadd.f32 %v1605, %v1606
    %v1608 = vsel %vm92, %v1420, 0.0
    %v1609 = vrot.slane %v1608, 4
    %v1610 = vadd.f32 %v1608, %v1609
    %v1611 = vrot.slane %v1610, 2
    %v1612 = vadd.f32 %v1610, %v1611
    %v1613 = vrot.slane %v1612, 1
    %v1614 = vadd.f32 %v1612, %v1613
    %v1615 = vsel %vm92, %v1421, 0.0
    %v1616 = vrot.slane %v1615, 4
    %v1617 = vadd.f32 %v1615, %v1616
    %v1618 = vrot.slane %v1617, 2
    %v1619 = vadd.f32 %v1617, %v1618
    %v1620 = vrot.slane %v1619, 1
    %v1621 = vadd.f32 %v1619, %v1620
    %v1622 = vsel %vm92, %v1422, 0.0
    %v1623 = vrot.slane %v1622, 4
    %v1624 = vadd.f32 %v1622, %v1623
    %v1625 = vrot.slane %v1624, 2
    %v1626 = vadd.f32 %v1624, %v1625
    %v1627 = vrot.slane %v1626, 1
    %v1628 = vadd.f32 %v1626, %v1627
    %v1629 = vsel %vm92, %v1423, 0.0
    %v1630 = vrot.slane %v1629, 4
    %v1631 = vadd.f32 %v1629, %v1630
    %v1632 = vrot.slane %v1631, 2
    %v1633 = vadd.f32 %v1631, %v1632
    %v1634 = vrot.slane %v1633, 1
    %v1635 = vadd.f32 %v1633, %v1634
    %v1636 = vsel %vm92, %v1424, 0.0
    %v1637 = vrot.slane %v1636, 4
    %v1638 = vadd.f32 %v1636, %v1637
    %v1639 = vrot.slane %v1638, 2
    %v1640 = vadd.f32 %v1638, %v1639
    %v1641 = vrot.slane %v1640, 1
    %v1642 = vadd.f32 %v1640, %v1641
    %v1643 = vsel %vm92, %v1425, 0.0
    %v1644 = vrot.slane %v1643, 4
    %v1645 = vadd.f32 %v1643, %v1644
    %v1646 = vrot.slane %v1645, 2
    %v1647 = vadd.f32 %v1645, %v1646
    %v1648 = vrot.slane %v1647, 1
    %v1649 = vadd.f32 %v1647, %v1648
    %v1650 = vmul.f32 %v1432, %v928
    %v1651 = vmul.f32 %v1439, %v943
    %v1652 = vmul.f32 %v1446, %v958
    %v1653 = vmul.f32 %v1453, %v973
    %v1654 = vmul.f32 %v1460, %v988
    %v1655 = vmul.f32 %v1467, %v1003
    %v1656 = vmul.f32 %v1474, %v1018
    %v1657 = vmul.f32 %v1481, %v1033
    %v1658 = vmul.f32 %v1488, %v1048
    %v1659 = vmul.f32 %v1495, %v1063
    %v1660 = vmul.f32 %v1502, %v1078
    %v1661 = vmul.f32 %v1509, %v1093
    %v1662 = vmul.f32 %v1516, %v1108
    %v1663 = vmul.f32 %v1523, %v1123
    %v1664 = vmul.f32 %v1530, %v1138
    %v1665 = vmul.f32 %v1537, %v1153
    %v1666 = vmul.f32 %v1544, %v1168
    %v1667 = vmul.f32 %v1551, %v1183
    %v1668 = vmul.f32 %v1558, %v1198
    %v1669 = vmul.f32 %v1565, %v1213
    %v1670 = vmul.f32 %v1572, %v1228
    %v1671 = vmul.f32 %v1579, %v1243
    %v1672 = vmul.f32 %v1586, %v1258
    %v1673 = vmul.f32 %v1593, %v1273
    %v1674 = vmul.f32 %v1600, %v1288
    %v1675 = vmul.f32 %v1607, %v1303
    %v1676 = vmul.f32 %v1614, %v1318
    %v1677 = vmul.f32 %v1621, %v1333
    %v1678 = vmul.f32 %v1628, %v1348
    %v1679 = vmul.f32 %v1635, %v1363
    %v1680 = vmul.f32 %v1642, %v1378
    %v1681 = vmul.f32 %v1649, %v1393
    %vm1682 = vcmask 253952
    %1683 = vst.msk [vmem:[#allocation7] sm:$0x1] %vm1682, %v1650
    %1684 = vst.msk [vmem:[#allocation7 + $0x1] sm:$0x1] %vm1682, %v1651
    %1685 = vst.msk [vmem:[#allocation7 + $0x2] sm:$0x1] %vm1682, %v1652
    %1686 = vst.msk [vmem:[#allocation7 + $0x3] sm:$0x1] %vm1682, %v1653
    %1687 = vst.msk [vmem:[#allocation7 + $0x4] sm:$0x1] %vm1682, %v1654
    %1688 = vst.msk [vmem:[#allocation7 + $0x5] sm:$0x1] %vm1682, %v1655
    %1689 = vst.msk [vmem:[#allocation7 + $0x6] sm:$0x1] %vm1682, %v1656
    %1690 = vst.msk [vmem:[#allocation7 + $0x7] sm:$0x1] %vm1682, %v1657
    %1691 = vst.msk [vmem:[#allocation7 + $0x8] sm:$0x1] %vm1682, %v1658
    %1692 = vst.msk [vmem:[#allocation7 + $0x9] sm:$0x1] %vm1682, %v1659
    %1693 = vst.msk [vmem:[#allocation7 + $0xa] sm:$0x1] %vm1682, %v1660
    %1694 = vst.msk [vmem:[#allocation7 + $0xb] sm:$0x1] %vm1682, %v1661
    %1695 = vst.msk [vmem:[#allocation7 + $0xc] sm:$0x1] %vm1682, %v1662
    %1696 = vst.msk [vmem:[#allocation7 + $0xd] sm:$0x1] %vm1682, %v1663
    %1697 = vst.msk [vmem:[#allocation7 + $0xe] sm:$0x1] %vm1682, %v1664
    %1698 = vst.msk [vmem:[#allocation7 + $0xf] sm:$0x1] %vm1682, %v1665
    %1699 = vst.msk [vmem:[#allocation7 + $0x10] sm:$0x1] %vm1682, %v1666
    %1700 = vst.msk [vmem:[#allocation7 + $0x11] sm:$0x1] %vm1682, %v1667
    %1701 = vst.msk [vmem:[#allocation7 + $0x12] sm:$0x1] %vm1682, %v1668
    %1702 = vst.msk [vmem:[#allocation7 + $0x13] sm:$0x1] %vm1682, %v1669
    %1703 = vst.msk [vmem:[#allocation7 + $0x14] sm:$0x1] %vm1682, %v1670
    %1704 = vst.msk [vmem:[#allocation7 + $0x15] sm:$0x1] %vm1682, %v1671
    %1705 = vst.msk [vmem:[#allocation7 + $0x16] sm:$0x1] %vm1682, %v1672
    %1706 = vst.msk [vmem:[#allocation7 + $0x17] sm:$0x1] %vm1682, %v1673
    %1707 = vst.msk [vmem:[#allocation7 + $0x18] sm:$0x1] %vm1682, %v1674
    %1708 = vst.msk [vmem:[#allocation7 + $0x19] sm:$0x1] %vm1682, %v1675
    %1709 = vst.msk [vmem:[#allocation7 + $0x1a] sm:$0x1] %vm1682, %v1676
    %1710 = vst.msk [vmem:[#allocation7 + $0x1b] sm:$0x1] %vm1682, %v1677
    %1711 = vst.msk [vmem:[#allocation7 + $0x1c] sm:$0x1] %vm1682, %v1678
    %1712 = vst.msk [vmem:[#allocation7 + $0x1d] sm:$0x1] %vm1682, %v1679
    %1713 = vst.msk [vmem:[#allocation7 + $0x1e] sm:$0x1] %vm1682, %v1680
    %1714 = vst.msk [vmem:[#allocation7 + $0x1f] sm:$0x1] %vm1682, %v1681
    %v1715 = vmul.f32 %v659, %v928
    %v1716 = vmul.f32 %v661, %v943
    %v1717 = vmul.f32 %v663, %v958
    %v1718 = vmul.f32 %v665, %v973
    %v1719 = vmul.f32 %v667, %v988
    %v1720 = vmul.f32 %v669, %v1003
    %v1721 = vmul.f32 %v671, %v1018
    %v1722 = vmul.f32 %v673, %v1033
    %v1723 = vmul.f32 %v675, %v1048
    %v1724 = vmul.f32 %v677, %v1063
    %v1725 = vmul.f32 %v679, %v1078
    %v1726 = vmul.f32 %v681, %v1093
    %v1727 = vmul.f32 %v683, %v1108
    %v1728 = vmul.f32 %v685, %v1123
    %v1729 = vmul.f32 %v687, %v1138
    %v1730 = vmul.f32 %v689, %v1153
    %v1731 = vmul.f32 %v691, %v1168
    %v1732 = vmul.f32 %v693, %v1183
    %v1733 = vmul.f32 %v695, %v1198
    %v1734 = vmul.f32 %v697, %v1213
    %v1735 = vmul.f32 %v699, %v1228
    %v1736 = vmul.f32 %v701, %v1243
    %v1737 = vmul.f32 %v703, %v1258
    %v1738 = vmul.f32 %v705, %v1273
    %v1739 = vmul.f32 %v707, %v1288
    %v1740 = vmul.f32 %v709, %v1303
    %v1741 = vmul.f32 %v711, %v1318
    %v1742 = vmul.f32 %v713, %v1333
    %v1743 = vmul.f32 %v715, %v1348
    %v1744 = vmul.f32 %v717, %v1363
    %v1745 = vmul.f32 %v719, %v1378
    %v1746 = vmul.f32 %v721, %v1393
    %vm1747 = vcmask 7168
    %1748 = vst.msk [vmem:[%s5] sm:$0xff] %vm1747, %v1715
    %1749 = vst.msk [vmem:[%s5 + $0x8] sm:$0xff] %vm1747, %v1716
    %1750 = vst.msk [vmem:[%s5 + $0x10] sm:$0xff] %vm1747, %v1717
    %1751 = vst.msk [vmem:[%s5 + $0x18] sm:$0xff] %vm1747, %v1718
    %1752 = vst.msk [vmem:[%s5 + $0x20] sm:$0xff] %vm1747, %v1719
    %1753 = vst.msk [vmem:[%s5 + $0x28] sm:$0xff] %vm1747, %v1720
    %1754 = vst.msk [vmem:[%s5 + $0x30] sm:$0xff] %vm1747, %v1721
    %1755 = vst.msk [vmem:[%s5 + $0x38] sm:$0xff] %vm1747, %v1722
    %1756 = vst.msk [vmem:[%s5 + $0x40] sm:$0xff] %vm1747, %v1723
    %1757 = vst.msk [vmem:[%s5 + $0x48] sm:$0xff] %vm1747, %v1724
    %1758 = vst.msk [vmem:[%s5 + $0x50] sm:$0xff] %vm1747, %v1725
    %1759 = vst.msk [vmem:[%s5 + $0x58] sm:$0xff] %vm1747, %v1726
    %1760 = vst.msk [vmem:[%s5 + $0x60] sm:$0xff] %vm1747, %v1727
    %1761 = vst.msk [vmem:[%s5 + $0x68] sm:$0xff] %vm1747, %v1728
    %1762 = vst.msk [vmem:[%s5 + $0x70] sm:$0xff] %vm1747, %v1729
    %1763 = vst.msk [vmem:[%s5 + $0x78] sm:$0xff] %vm1747, %v1730
    %1764 = vst.msk [vmem:[%s5 + $0x80] sm:$0xff] %vm1747, %v1731
    %1765 = vst.msk [vmem:[%s5 + $0x88] sm:$0xff] %vm1747, %v1732
    %1766 = vst.msk [vmem:[%s5 + $0x90] sm:$0xff] %vm1747, %v1733
    %1767 = vst.msk [vmem:[%s5 + $0x98] sm:$0xff] %vm1747, %v1734
    %1768 = vst.msk [vmem:[%s5 + $0xa0] sm:$0xff] %vm1747, %v1735
    %1769 = vst.msk [vmem:[%s5 + $0xa8] sm:$0xff] %vm1747, %v1736
    %1770 = vst.msk [vmem:[%s5 + $0xb0] sm:$0xff] %vm1747, %v1737
    %1771 = vst.msk [vmem:[%s5 + $0xb8] sm:$0xff] %vm1747, %v1738
    %1772 = vst.msk [vmem:[%s5 + $0xc0] sm:$0xff] %vm1747, %v1739
    %1773 = vst.msk [vmem:[%s5 + $0xc8] sm:$0xff] %vm1747, %v1740
    %1774 = vst.msk [vmem:[%s5 + $0xd0] sm:$0xff] %vm1747, %v1741
    %1775 = vst.msk [vmem:[%s5 + $0xd8] sm:$0xff] %vm1747, %v1742
    %1776 = vst.msk [vmem:[%s5 + $0xe0] sm:$0xff] %vm1747, %v1743
    %1777 = vst.msk [vmem:[%s5 + $0xe8] sm:$0xff] %vm1747, %v1744
    %1778 = vst.msk [vmem:[%s5 + $0xf0] sm:$0xff] %vm1747, %v1745
    %1779 = vst.msk [vmem:[%s5 + $0xf8] sm:$0xff] %vm1747, %v1746
    // Predicated region
    $region26: #{tpu_custom_call.1} parent=1 // pred_check
      _
    $region27: #{tpu_custom_call.1} parent=1 // pred_check_branch
      %1781 = sbr.rel (0) target = $region29
    $region28: #{tpu_custom_call.1} parent=1 // pred_region
      %1783 = vsyncadd [#allocation4], 0
      %s1784 = sshll.u32 [#allocation7], 4
      %s1785 = int_to_ptr.vmem [resolvable:$true] %s1784
      %s1786 = sshll.u32 %s4, 4
      %s1787 = int_to_ptr.hbm [resolvable:$true] %s1786
      %1792 = dma.vmem_to_hbm [thread:$0]  %s1785, 512, %s1787, [#allocation4], 16, 16, 1
    $region29: #{tpu_custom_call.1} parent=1 // pred_fallthru
      _
    // Predicated region
    $region30: #{tpu_custom_call.1} parent=1 // pred_check
      _
    $region31: #{tpu_custom_call.1} parent=1 // pred_check_branch
      %1794 = sbr.rel (0) target = $region33
    $region32: #{tpu_custom_call.1} parent=1 // pred_region
      _
    $region33: #{tpu_custom_call.1} parent=1 // pred_fallthru
      _
    // Predicated region
    $region34: #{tpu_custom_call.1} parent=1 // pred_check
      _
    $region35: #{tpu_custom_call.1} parent=1 // pred_check_branch
      %1796 = sbr.rel (0) target = $region37
    $region36: #{tpu_custom_call.1} parent=1 // pred_region
      %1798 = dma.done [#allocation4], 512
    $region37: #{tpu_custom_call.1} parent=1 // pred_fallthru
      _
    // Predicated region
    $region38: #{tpu_custom_call.1} parent=1 // pred_check
      _
    $region39: #{tpu_custom_call.1} parent=1 // pred_check_branch
      %1800 = sbr.rel (0) target = $region41
    $region40: #{tpu_custom_call.1} parent=1 // pred_region
      _
    $region41: #{tpu_custom_call.1} parent=1 // pred_fallthru
      _
    %1801 = vsyncpa [#allocation3], 1
    %1802 = vsyncpa [#allocation6], 1
    %1803 = vsyncpa [#allocation4], 1

</llo_original>
